<compile_context>
chip_gen: v6e
topology: v6e:2x2x1
jax: 0.10.0
libtpu: 0.0.40
codegen_flags: <defaults>
</compile_context>

<pallas_src>
import jax
import jax.numpy as jnp
from jax.experimental import pallas as pl
from jax.experimental.pallas import tpu as pltpu


def _leaky_relu(z, negative_slope=0.2):
    return jnp.where(z >= 0, z, negative_slope * z)


def _round_up(x, m):
    return (x + m - 1) // m * m


def _mlp_kernel(x_ref,
                w1_ref, b1_ref,
                w2_ref, b2_ref,
                w3_ref, b3_ref,
                w4_ref, b4_ref,
                out_ref,
                acc_ref):
    """Grid = (batch tile i, layer-1 K tile k).  Accumulate layer 1 over k;
    run layers 2-4 and write the logit only on the last k step."""
    k = pl.program_id(1)

    @pl.when(k == 0)
    def _():
        acc_ref[...] = jnp.zeros_like(acc_ref)

    # Layer 1 partial: cast the f32 x tile to bf16 on-chip, MXU matmul, f32 acc.
    acc_ref[...] += jnp.dot(x_ref[...].astype(jnp.bfloat16), w1_ref[...],
                            preferred_element_type=jnp.float32)

    @pl.when(k == pl.num_programs(1) - 1)
    def _():
        h = _leaky_relu(acc_ref[...] + b1_ref[...])                 # (T, 512) f32
        # Layer 2.
        h = jnp.dot(h.astype(jnp.bfloat16), w2_ref[...],
                    preferred_element_type=jnp.float32)
        h = _leaky_relu(h + b2_ref[...])                            # (T, 256) f32
        # Layer 3.
        h = jnp.dot(h.astype(jnp.bfloat16), w3_ref[...],
                    preferred_element_type=jnp.float32)
        h = _leaky_relu(h + b3_ref[...])                            # (T, 256) f32
        # Layer 4 (256 -> 1): VPU multiply + lane reduction.
        logit = jnp.sum(h * w4_ref[...], axis=-1, keepdims=True) + b4_ref[...]
        out_ref[...] = logit.astype(out_ref.dtype)                  # (T, 1)


def init_params(key, in_shape, hidden_dims):
    """Deterministic init matching nn.Linear's U(-1/sqrt(fan_in), 1/sqrt(fan_in)).

    Weights are produced in (in_features, out_features) layout, f32.
    """
    data_dim = 1
    for d in in_shape:
        data_dim *= d
    feats = [data_dim, *hidden_dims, 1]
    params = []
    for fan_in, fan_out in zip(feats[:-1], feats[1:]):
        key, kw, kb = jax.random.split(key, 3)
        bound = 1.0 / (fan_in ** 0.5)
        w = jax.random.uniform(kw, (fan_in, fan_out), jnp.float32, -bound, bound)
        b = jax.random.uniform(kb, (1, fan_out), jnp.float32, -bound, bound)
        params.append((w, b))
    return params


def prepare_params(params, k_multiple=256):
    """One-time, out-of-forward prep: bf16 weight casts + zero-pad w1 rows so
    data_dim is a multiple of `k_multiple` (MXU-tile aligned K loop)."""
    (w1, b1), (w2, b2), (w3, b3), (w4, b4) = params
    data_dim = w1.shape[0]
    dp = _round_up(data_dim, k_multiple)
    if dp != data_dim:
        w1 = jnp.pad(w1, ((0, dp - data_dim), (0, 0)))
    return {
        "w1": w1.astype(jnp.bfloat16),
        "b1": b1.reshape(1, -1).astype(jnp.float32),
        "w2": w2.astype(jnp.bfloat16),
        "b2": b2.reshape(1, -1).astype(jnp.float32),
        "w3": w3.astype(jnp.bfloat16),
        "b3": b3.reshape(1, -1).astype(jnp.float32),
        "w4": w4.reshape(1, -1).astype(jnp.float32),   # (1, 256) for VPU reduction
        "b4": b4.reshape(1, 1).astype(jnp.float32),
    }


@jax.jit
def fc_discriminator_forward(x_nchw, prep):
    """Forward pass. x_nchw: (N, C, H, W) (or any trailing shape). -> (N, 1) f32 logits."""
    n = x_nchw.shape[0]
    x_flat = x_nchw.reshape(n, -1).astype(jnp.float32)   # == torch .view(len(x), -1)
    data_dim = x_flat.shape[1]

    w1, b1 = prep["w1"], prep["b1"]
    w2, b2 = prep["w2"], prep["b2"]
    w3, b3 = prep["w3"], prep["b3"]
    w4_row, b4_s = prep["w4"], prep["b4"]
    dp = w1.shape[0]                  # data_dim padded to multiple of 256
    h1, h2, h3 = w1.shape[1], w2.shape[1], w3.shape[1]

    # ---- Batch tiling: up to 512 rows/tile; keep >=2 tiles for big batches so
    # the "parallel" axis can feed both v7x TensorCores.
    n8 = _round_up(n, 8)
    tile_n = min(512, n8)
    if n8 >= 256 and pl.cdiv(n8, tile_n) < 2:
        tile_n = _round_up(pl.cdiv(n8, 2), 8)
    grid_n = pl.cdiv(n8, tile_n)
    n_pad = grid_n * tile_n

    # ---- Layer-1 K tiling: tile_k divides dp (dp is a multiple of 256).
    max_tk = 2048
    if dp <= max_tk:
        tile_k = dp
    else:
        tile_k = max_tk
        while dp % tile_k:
            tile_k -= 256
    grid_k = dp // tile_k

    # Single pad (only when needed): rows up to n_pad, cols up to dp.
    pad_rows, pad_cols = n_pad - n, dp - data_dim
    if pad_rows or pad_cols:
        x_flat = jnp.pad(x_flat, ((0, pad_rows), (0, pad_cols)))

    def _const(shape):
        # Constant index_map -> block stays resident in VMEM across the grid.
        return pl.BlockSpec(shape, lambda i, k: (0, 0))

    in_specs = [
        pl.BlockSpec((tile_n, tile_k), lambda i, k: (i, k)),   # x tile (pipelined)
        pl.BlockSpec((tile_k, h1), lambda i, k: (k, 0)),       # w1 K-tile (streamed)
        _const((1, h1)),
        _const((h1, h2)), _const((1, h2)),
        _const((h2, h3)), _const((1, h3)),
        _const((1, h3)), _const((1, 1)),
    ]
    out_spec = pl.BlockSpec((tile_n, 1), lambda i, k: (i, 0))

    # VMEM budget from actual tile sizes (double-buffered inputs) + headroom.
    vmem_bytes = (
        2 * tile_n * tile_k * 4                   # x tile, f32, double-buffered
        + 2 * tile_k * h1 * 2                     # w1 tile, bf16, double-buffered
        + 2 * (h1 * h2 + h2 * h3) * 2             # w2, w3 (bf16, 2 bufs)
        + 2 * (h1 + h2 + 2 * h3 + 1) * 4          # biases + w4_row + b4
        + tile_n * h1 * 4                         # f32 accumulator scratch
        + 2 * tile_n * 4                          # out tile
        + 6 * tile_n * h1 * 4                     # epilogue temporaries headroom
    )
    vmem_limit = int(min(max(vmem_bytes, 16 << 20), 48 << 20))

    flops = 2 * n_pad * (dp * h1 + h1 * h2 + h2 * h3 + h3)
    bytes_accessed = (
        n_pad * dp * 4                                    # f32 x read
        + (dp * h1 + h1 * h2 + h2 * h3) * 2               # bf16 weights
        + (h1 + h2 + 2 * h3 + 1) * 4                      # f32 biases + w4_row
        + n_pad * 4                                       # f32 logits out
    )

    grid_spec = pltpu.PrefetchScalarGridSpec(
        num_scalar_prefetch=0,
        grid=(grid_n, grid_k),
        in_specs=in_specs,
        out_specs=out_spec,
        scratch_shapes=[pltpu.VMEM((tile_n, h1), jnp.float32)],
    )

    out = pl.pallas_call(
        _mlp_kernel,
        out_shape=jax.ShapeDtypeStruct((n_pad, 1), jnp.float32),
        grid_spec=grid_spec,
        compiler_params=pltpu.CompilerParams(
            dimension_semantics=("parallel", "arbitrary"),
            vmem_limit_bytes=vmem_limit,
        ),
        cost_estimate=pl.CostEstimate(
            flops=flops, transcendentals=0, bytes_accessed=bytes_accessed),
    )(x_flat, w1, b1, w2, b2, w3, b3, w4_row, b4_s)
    return out[:n]


def _reference_forward_kernel_numerics(x_nchw, params):
    """Pure-JAX reference mirroring the kernel's bf16/f32 numerics."""
    (w1, b1), (w2, b2), (w3, b3), (w4, b4) = params
    h_lo = x_nchw.reshape(x_nchw.shape[0], -1).astype(jnp.bfloat16)
    h = None
    for w, b in ((w1, b1), (w2, b2), (w3, b3)):
        z = jnp.dot(h_lo, w.astype(jnp.bfloat16),
                    preferred_element_type=jnp.float32) + b
        h = jnp.where(z >= 0, z, 0.2 * z)            # f32
        h_lo = h.astype(jnp.bfloat16)
    return jnp.sum(h * w4.reshape(1, -1), axis=-1, keepdims=True) + b4.reshape(1, 1)


def _reference_forward_f32(x_nchw, params):
    """Pure-f32 reference matching the PyTorch module semantics."""
    h = x_nchw.reshape(x_nchw.shape[0], -1).astype(jnp.float32)
    n_layers = len(params)
    for i, (w, b) in enumerate(params):
        h = h @ w + b
        if i < n_layers - 1:
            h = jnp.where(h >= 0, h, 0.2 * h)
    return h


if __name__ == "__main__":
    # Small shapes consistent with the module: in_shape=(4, 16, 16) -> data_dim=1024.
    batch = 2
    in_shape = (4, 16, 16)
    hidden_dims = [512, 256, 256]

    key = jax.random.PRNGKey(0)
    k_param, k_x = jax.random.split(key)

    params = init_params(k_param, in_shape, hidden_dims)
    prep = prepare_params(params)                        # one-time bf16 cast / K pad
    x = jax.random.normal(k_x, (batch, *in_shape), jnp.float32)   # NCHW

    logits = fc_discriminator_forward(x, prep)
    jax.block_until_ready(logits)
    assert logits.shape == (batch, 1), logits.shape

    # Tight check against a reference that mirrors the kernel's bf16/f32 math.
    ref_bf16 = _reference_forward_kernel_numerics(x, params)
    assert jnp.allclose(logits, ref_bf16, atol=1e-3, rtol=1e-3), (logits, ref_bf16)

    # Loose sanity check against the pure-f32 PyTorch-equivalent math.
    ref_f32 = _reference_forward_f32(x, params)
    assert jnp.allclose(logits, ref_f32, atol=3e-2, rtol=3e-2), (logits, ref_f32)

    print("KERNEL_OK")
</pallas_src>

<mosaic_0001>
module attributes {stable_mosaic.version = 11 : i64} {
  func.func @_mlp_kernel(%arg0: i32, %arg1: i32, %arg2: memref<8x1024xf32, #tpu.memory_space<vmem>>, %arg3: memref<1024x512xbf16, #tpu.memory_space<vmem>>, %arg4: memref<1x512xf32, #tpu.memory_space<vmem>>, %arg5: memref<512x256xbf16, #tpu.memory_space<vmem>>, %arg6: memref<1x256xf32, #tpu.memory_space<vmem>>, %arg7: memref<256x256xbf16, #tpu.memory_space<vmem>>, %arg8: memref<1x256xf32, #tpu.memory_space<vmem>>, %arg9: memref<1x256xf32, #tpu.memory_space<vmem>>, %arg10: memref<1x1xf32, #tpu.memory_space<vmem>>, %arg11: memref<8x1xf32, #tpu.memory_space<vmem>>, %arg12: memref<8x512xf32, #tpu.memory_space<vmem>>) attributes {dimension_semantics = [#tpu.dimension_semantics<parallel>, #tpu.dimension_semantics<arbitrary>], iteration_bounds = array<i64: 1, 1>, scalar_prefetch = 0 : i64, scratch_operands = 1 : i64, tpu.core_type = #tpu.core_type<tc>, window_params = [{transform_indices = @transform_0, window_bounds = array<i64: 8, 1024>}, {transform_indices = @transform_1, window_bounds = array<i64: 1024, 512>}, {pipeline_mode = #tpu.pipeline_mode<synchronous>, transform_indices = @transform_2, window_bounds = array<i64: 1, 512>}, {pipeline_mode = #tpu.pipeline_mode<synchronous>, transform_indices = @transform_3, window_bounds = array<i64: 512, 256>}, {pipeline_mode = #tpu.pipeline_mode<synchronous>, transform_indices = @transform_4, window_bounds = array<i64: 1, 256>}, {pipeline_mode = #tpu.pipeline_mode<synchronous>, transform_indices = @transform_5, window_bounds = array<i64: 256, 256>}, {pipeline_mode = #tpu.pipeline_mode<synchronous>, transform_indices = @transform_6, window_bounds = array<i64: 1, 256>}, {pipeline_mode = #tpu.pipeline_mode<synchronous>, transform_indices = @transform_7, window_bounds = array<i64: 1, 256>}, {pipeline_mode = #tpu.pipeline_mode<synchronous>, transform_indices = @transform_8, window_bounds = array<i64: 1, 1>}, {transform_indices = @transform_9, window_bounds = array<i64: 8, 1>}]} {
    %c0_i32 = arith.constant 0 : i32
    %0 = arith.cmpi eq, %arg1, %c0_i32 : i32
    %1 = arith.extui %0 : i1 to i32
    %c0_i32_0 = arith.constant 0 : i32
    %2 = arith.cmpi ne, %1, %c0_i32_0 : i32
    scf.if %2 {
      %cst_10 = arith.constant 0.000000e+00 : f32
      %13 = vector.broadcast %cst_10 : f32 to vector<8x512xf32>
      %c0_11 = arith.constant 0 : index
      %c0_12 = arith.constant 0 : index
      %14 = vector.load %arg12[%c0_11, %c0_12] : memref<8x512xf32, #tpu.memory_space<vmem>>, vector<8x512xf32>
      tpu.vector_store %arg12[%c0_11, %c0_12], %13 {strides = array<i32>} : memref<8x512xf32, #tpu.memory_space<vmem>>, vector<8x512xf32>,
    } else {
    }
    %c0 = arith.constant 0 : index
    %c0_1 = arith.constant 0 : index
    %3 = vector.load %arg12[%c0, %c0_1] : memref<8x512xf32, #tpu.memory_space<vmem>>, vector<8x512xf32>
    %c0_2 = arith.constant 0 : index
    %c0_3 = arith.constant 0 : index
    %4 = vector.load %arg2[%c0_2, %c0_3] : memref<8x1024xf32, #tpu.memory_space<vmem>>, vector<8x1024xf32>
    %5 = arith.truncf %4 : vector<8x1024xf32> to vector<8x1024xbf16>
    %c0_4 = arith.constant 0 : index
    %c0_5 = arith.constant 0 : index
    %6 = vector.load %arg3[%c0_4, %c0_5] : memref<1024x512xbf16, #tpu.memory_space<vmem>>, vector<1024x512xbf16>
    %cst = arith.constant dense<0.000000e+00> : vector<8x512xf32>
    %7 = tpu.matmul %5, %6, %cst {dimension_numbers = #tpu.dot_dimension_numbers<[1], [0], [0], [1], [0, 0, 1, 1], [], []>} : vector<8x1024xbf16>, vector<1024x512xbf16>, vector<8x512xf32> -> vector<8x512xf32>
    %8 = arith.addf %3, %7 : vector<8x512xf32>
    %c0_6 = arith.constant 0 : index
    %c0_7 = arith.constant 0 : index
    %9 = vector.load %arg12[%c0_6, %c0_7] : memref<8x512xf32, #tpu.memory_space<vmem>>, vector<8x512xf32>
    tpu.vector_store %arg12[%c0_6, %c0_7], %8 {strides = array<i32>} : memref<8x512xf32, #tpu.memory_space<vmem>>, vector<8x512xf32>,
    %c0_i32_8 = arith.constant 0 : i32
    %10 = arith.cmpi eq, %arg1, %c0_i32_8 : i32
    %11 = arith.extui %10 : i1 to i32
    %c0_i32_9 = arith.constant 0 : i32
    %12 = arith.cmpi ne, %11, %c0_i32_9 : i32
    scf.if %12 {
      %c0_10 = arith.constant 0 : index
      %c0_11 = arith.constant 0 : index
      %13 = vector.load %arg12[%c0_10, %c0_11] : memref<8x512xf32, #tpu.memory_space<vmem>>, vector<8x512xf32>
      %c0_12 = arith.constant 0 : index
      %c0_13 = arith.constant 0 : index
      %14 = vector.load %arg4[%c0_12, %c0_13] : memref<1x512xf32, #tpu.memory_space<vmem>>, vector<1x512xf32>
      %15 = vector.broadcast %14 : vector<1x512xf32> to vector<8x512xf32>
      %16 = arith.addf %13, %15 : vector<8x512xf32>
      %cst_14 = arith.constant 0.000000e+00 : f32
      %17 = vector.broadcast %cst_14 : f32 to vector<8x512xf32>
      %18 = arith.cmpf oge, %16, %17 : vector<8x512xf32>
      %cst_15 = arith.constant 2.000000e-01 : f32
      %19 = vector.broadcast %cst_15 : f32 to vector<8x512xf32>
      %20 = arith.mulf %19, %16 : vector<8x512xf32>
      %21 = arith.select %18, %16, %20 : vector<8x512xi1>, vector<8x512xf32>
      %22 = arith.truncf %21 : vector<8x512xf32> to vector<8x512xbf16>
      %c0_16 = arith.constant 0 : index
      %c0_17 = arith.constant 0 : index
      %23 = vector.load %arg5[%c0_16, %c0_17] : memref<512x256xbf16, #tpu.memory_space<vmem>>, vector<512x256xbf16>
      %cst_18 = arith.constant dense<0.000000e+00> : vector<8x256xf32>
      %24 = tpu.matmul %22, %23, %cst_18 {dimension_numbers = #tpu.dot_dimension_numbers<[1], [0], [0], [1], [0, 0, 1, 1], [], []>} : vector<8x512xbf16>, vector<512x256xbf16>, vector<8x256xf32> -> vector<8x256xf32>
      %c0_19 = arith.constant 0 : index
      %c0_20 = arith.constant 0 : index
      %25 = vector.load %arg6[%c0_19, %c0_20] : memref<1x256xf32, #tpu.memory_space<vmem>>, vector<1x256xf32>
      %26 = vector.broadcast %25 : vector<1x256xf32> to vector<8x256xf32>
      %27 = arith.addf %24, %26 : vector<8x256xf32>
      %cst_21 = arith.constant 0.000000e+00 : f32
      %28 = vector.broadcast %cst_21 : f32 to vector<8x256xf32>
      %29 = arith.cmpf oge, %27, %28 : vector<8x256xf32>
      %cst_22 = arith.constant 2.000000e-01 : f32
      %30 = vector.broadcast %cst_22 : f32 to vector<8x256xf32>
      %31 = arith.mulf %30, %27 : vector<8x256xf32>
      %32 = arith.select %29, %27, %31 : vector<8x256xi1>, vector<8x256xf32>
      %33 = arith.truncf %32 : vector<8x256xf32> to vector<8x256xbf16>
      %c0_23 = arith.constant 0 : index
      %c0_24 = arith.constant 0 : index
      %34 = vector.load %arg7[%c0_23, %c0_24] : memref<256x256xbf16, #tpu.memory_space<vmem>>, vector<256x256xbf16>
      %cst_25 = arith.constant dense<0.000000e+00> : vector<8x256xf32>
      %35 = tpu.matmul %33, %34, %cst_25 {dimension_numbers = #tpu.dot_dimension_numbers<[1], [0], [0], [1], [0, 0, 1, 1], [], []>} : vector<8x256xbf16>, vector<256x256xbf16>, vector<8x256xf32> -> vector<8x256xf32>
      %c0_26 = arith.constant 0 : index
      %c0_27 = arith.constant 0 : index
      %36 = vector.load %arg8[%c0_26, %c0_27] : memref<1x256xf32, #tpu.memory_space<vmem>>, vector<1x256xf32>
      %37 = vector.broadcast %36 : vector<1x256xf32> to vector<8x256xf32>
      %38 = arith.addf %35, %37 : vector<8x256xf32>
      %cst_28 = arith.constant 0.000000e+00 : f32
      %39 = vector.broadcast %cst_28 : f32 to vector<8x256xf32>
      %40 = arith.cmpf oge, %38, %39 : vector<8x256xf32>
      %cst_29 = arith.constant 2.000000e-01 : f32
      %41 = vector.broadcast %cst_29 : f32 to vector<8x256xf32>
      %42 = arith.mulf %41, %38 : vector<8x256xf32>
      %43 = arith.select %40, %38, %42 : vector<8x256xi1>, vector<8x256xf32>
      %c0_30 = arith.constant 0 : index
      %c0_31 = arith.constant 0 : index
      %44 = vector.load %arg9[%c0_30, %c0_31] : memref<1x256xf32, #tpu.memory_space<vmem>>, vector<1x256xf32>
      %45 = vector.broadcast %44 : vector<1x256xf32> to vector<8x256xf32>
      %46 = arith.mulf %43, %45 : vector<8x256xf32>
      %cst_32 = arith.constant dense<0.000000e+00> : vector<8xf32>
      %47 = vector.multi_reduction <add>, %46, %cst_32 [1] : vector<8x256xf32> to vector<8xf32>
      %48 = vector.shape_cast %47 : vector<8xf32> to vector<8x1xf32>
      %c0_33 = arith.constant 0 : index
      %c0_34 = arith.constant 0 : index
      %49 = vector.load %arg10[%c0_33, %c0_34] : memref<1x1xf32, #tpu.memory_space<vmem>>, vector<1x1xf32>
      %50 = vector.broadcast %49 : vector<1x1xf32> to vector<8x1xf32>
      %51 = arith.addf %48, %50 : vector<8x1xf32>
      %c0_35 = arith.constant 0 : index
      %c0_36 = arith.constant 0 : index
      %52 = vector.load %arg11[%c0_35, %c0_36] : memref<8x1xf32, #tpu.memory_space<vmem>>, vector<8x1xf32>
      tpu.vector_store %arg11[%c0_35, %c0_36], %51 {strides = array<i32>} : memref<8x1xf32, #tpu.memory_space<vmem>>, vector<8x1xf32>,
    } else {
    }
    return
  }
  func.func @transform_0(%arg0: i32, %arg1: i32) -> (i32, i32) {
    %c0_i32 = arith.constant 0 : i32
    return %arg0, %arg1 : i32, i32
  }
  func.func @transform_1(%arg0: i32, %arg1: i32) -> (i32, i32) {
    %c0_i32 = arith.constant 0 : i32
    %c0_i32_0 = arith.constant 0 : i32
    return %arg1, %c0_i32 : i32, i32
  }
  func.func @transform_2(%arg0: i32, %arg1: i32) -> (i32, i32) {
    %c0_i32 = arith.constant 0 : i32
    %c0_i32_0 = arith.constant 0 : i32
    %c0_i32_1 = arith.constant 0 : i32
    return %c0_i32, %c0_i32_0 : i32, i32
  }
  func.func @transform_3(%arg0: i32, %arg1: i32) -> (i32, i32) {
    %c0_i32 = arith.constant 0 : i32
    %c0_i32_0 = arith.constant 0 : i32
    %c0_i32_1 = arith.constant 0 : i32
    return %c0_i32, %c0_i32_0 : i32, i32
  }
  func.func @transform_4(%arg0: i32, %arg1: i32) -> (i32, i32) {
    %c0_i32 = arith.constant 0 : i32
    %c0_i32_0 = arith.constant 0 : i32
    %c0_i32_1 = arith.constant 0 : i32
    return %c0_i32, %c0_i32_0 : i32, i32
  }
  func.func @transform_5(%arg0: i32, %arg1: i32) -> (i32, i32) {
    %c0_i32 = arith.constant 0 : i32
    %c0_i32_0 = arith.constant 0 : i32
    %c0_i32_1 = arith.constant 0 : i32
    return %c0_i32, %c0_i32_0 : i32, i32
  }
  func.func @transform_6(%arg0: i32, %arg1: i32) -> (i32, i32) {
    %c0_i32 = arith.constant 0 : i32
    %c0_i32_0 = arith.constant 0 : i32
    %c0_i32_1 = arith.constant 0 : i32
    return %c0_i32, %c0_i32_0 : i32, i32
  }
  func.func @transform_7(%arg0: i32, %arg1: i32) -> (i32, i32) {
    %c0_i32 = arith.constant 0 : i32
    %c0_i32_0 = arith.constant 0 : i32
    %c0_i32_1 = arith.constant 0 : i32
    return %c0_i32, %c0_i32_0 : i32, i32
  }
  func.func @transform_8(%arg0: i32, %arg1: i32) -> (i32, i32) {
    %c0_i32 = arith.constant 0 : i32
    %c0_i32_0 = arith.constant 0 : i32
    %c0_i32_1 = arith.constant 0 : i32
    return %c0_i32, %c0_i32_0 : i32, i32
  }
  func.func @transform_9(%arg0: i32, %arg1: i32) -> (i32, i32) {
    %c0_i32 = arith.constant 0 : i32
    %c0_i32_0 = arith.constant 0 : i32
    return %arg0, %c0_i32 : i32, i32
  }
}

</mosaic_0001>

<llo_original>
// kernel: fc_discriminator_forward.1
$region0: #{fc_discriminator_forward.1}
  #allocation0 [shape = 'u32[]', space=smem, size = 0x4, offset = 0x4, fixed_abs, tag = 'smem constant byte address 0x4 - core index']
  #allocation1 [shape = 'u32[144,128]{1,0:T(1,128)}', space=vmem, size = 0x12000, scoped, tag = 'internal scratch']
  #allocation2 [shape = 'f32[8,512]{1,0:T(8,128)}', space=vmem, size = 0x4000, scoped, tag = 'scratch operand']
  #allocation3 [shape = 'f32[1,1]{1,0:T(1,128)S(1)}', space=vmem, size = 0x200, scoped, tag = 'scoped memory for fc_discriminator_forward.1']
  %s0 = inlined_call_operand.vmem [shape: f32[8,1024], index: 0, kind: input, shape index: {}]
  %s1 = inlined_call_operand.hbm [shape: bf16[1024,512], index: 1, kind: input, shape index: {}]
  %s2 = inlined_call_operand.vmem [shape: f32[1,512], index: 2, kind: input, shape index: {}]
  %s3 = inlined_call_operand.hbm [shape: bf16[512,256], index: 3, kind: input, shape index: {}]
  %s4 = inlined_call_operand.vmem [shape: f32[1,256], index: 4, kind: input, shape index: {}]
  %s5 = inlined_call_operand.hbm [shape: bf16[256,256], index: 5, kind: input, shape index: {}]
  %s6 = inlined_call_operand.vmem [shape: f32[1,256], index: 6, kind: input, shape index: {}]
  %s7 = inlined_call_operand.vmem [shape: f32[1,256], index: 7, kind: input, shape index: {}]
  %s8 = inlined_call_operand.<no memory space> [shape: f32[1,1], index: 8, kind: input, shape index: {}]
  %s9 = inlined_call_operand.vmem [shape: f32[8,1], index: 9, kind: output, shape index: {}]
  %s10 = sld [smem:[#allocation0]]
  $region66: #{fc_discriminator_forward.1} parent=0
    _
  %s12 = ssub.s32 1, %s10
  %s13 = scalar_select 0, %s12, %s10
  %v14 = vstv %s8
  %15 = vst [vmem:[#allocation3] sm:$0x1] %v14
  $region1: #{fc_discriminator_forward.1} parent=0
    #allocation4 [shape = 'u8[1048576]{0}', space=vmem, size = 0x100000, scoped, tag = 'input window, operand 1, single buffered']
    #allocation5 [shape = 's32[1]{0}', space=sflag, size = 0x4, scoped, tag = 'scoped memory for fc_discriminator_forward.1']
    #allocation6 [shape = 'u8[262144]{0}', space=vmem, size = 0x40000, scoped, tag = 'input window, operand 3, single buffered']
    #allocation7 [shape = 's32[1]{0}', space=sflag, size = 0x4, scoped, tag = 'scoped memory for fc_discriminator_forward.1']
    #allocation8 [shape = 'u8[131072]{0}', space=vmem, size = 0x20000, scoped, tag = 'input window, operand 5, single buffered']
    %16 = vsyncpa [#allocation5], 0
    %17 = vsyncpa [#allocation7], 0
    // Predicated region
    $region2: #{fc_discriminator_forward.1} parent=1 // pred_check
      _
    $region3: #{fc_discriminator_forward.1} parent=1 // pred_check_branch
      %19 = sbr.rel (0) target = $region5
    $region4: #{fc_discriminator_forward.1} parent=1 // pred_region
      _
    $region5: #{fc_discriminator_forward.1} parent=1 // pred_fallthru
      _
    // Predicated region
    $region6: #{fc_discriminator_forward.1} parent=1 // pred_check
      _
    $region7: #{fc_discriminator_forward.1} parent=1 // pred_check_branch
      %21 = sbr.rel (0) target = $region9
    $region8: #{fc_discriminator_forward.1} parent=1 // pred_region
      %s23 = ssub.s32 32768, 32768
      %24 = vsyncadd [#allocation5], %s23
      %s25 = sshll.u32 [#allocation4], 4
      %s26 = int_to_ptr.vmem [resolvable:$true] %s25
      %31 = dma.hbm_to_vmem [thread:$0]  %s1, 32768, %s26, [#allocation5], 256, 256, 16
    $region9: #{fc_discriminator_forward.1} parent=1 // pred_fallthru
      _
    // Predicated region
    $region10: #{fc_discriminator_forward.1} parent=1 // pred_check
      _
    $region11: #{fc_discriminator_forward.1} parent=1 // pred_check_branch
      %33 = sbr.rel (0) target = $region13
    $region12: #{fc_discriminator_forward.1} parent=1 // pred_region
      _
    $region13: #{fc_discriminator_forward.1} parent=1 // pred_fallthru
      _
    // Predicated region
    $region14: #{fc_discriminator_forward.1} parent=1 // pred_check
      _
    $region15: #{fc_discriminator_forward.1} parent=1 // pred_check_branch
      %35 = sbr.rel (0) target = $region17
    $region16: #{fc_discriminator_forward.1} parent=1 // pred_region
      %s37 = ssub.s32 8192, 8192
      %38 = vsyncadd [#allocation7], %s37
      %s39 = sshll.u32 [#allocation6], 4
      %s40 = int_to_ptr.vmem [resolvable:$true] %s39
      %45 = dma.hbm_to_vmem [thread:$0]  %s3, 8192, %s40, [#allocation7], 128, 128, 8
    $region17: #{fc_discriminator_forward.1} parent=1 // pred_fallthru
      _
    // Predicated region
    $region18: #{fc_discriminator_forward.1} parent=1 // pred_check
      _
    $region19: #{fc_discriminator_forward.1} parent=1 // pred_check_branch
      %47 = sbr.rel (0) target = $region21
    $region20: #{fc_discriminator_forward.1} parent=1 // pred_region
      _
    $region21: #{fc_discriminator_forward.1} parent=1 // pred_fallthru
      _
    // Predicated region
    $region22: #{fc_discriminator_forward.1} parent=1 // pred_check
      _
    $region23: #{fc_discriminator_forward.1} parent=1 // pred_check_branch
      %49 = sbr.rel (0) target = $region25
    $region24: #{fc_discriminator_forward.1} parent=1 // pred_region
      %s51 = ssub.s32 4096, 4096
      %52 = vsyncadd [#allocation7], %s51
      %s53 = sshll.u32 [#allocation8], 4
      %s54 = int_to_ptr.vmem [resolvable:$true] %s53
      %59 = dma.hbm_to_vmem [thread:$0]  %s5, 4096, %s54, [#allocation7], 128, 128, 8
    $region25: #{fc_discriminator_forward.1} parent=1 // pred_fallthru
      _
    // Predicated region
    $region26: #{fc_discriminator_forward.1} parent=1 // pred_check
      _
    $region27: #{fc_discriminator_forward.1} parent=1 // pred_check_branch
      %61 = sbr.rel (0) target = $region29
    $region28: #{fc_discriminator_forward.1} parent=1 // pred_region
      _
    $region29: #{fc_discriminator_forward.1} parent=1 // pred_fallthru
      _
    // Predicated region
    $region30: #{fc_discriminator_forward.1} parent=1 // pred_check
      _
    $region31: #{fc_discriminator_forward.1} parent=1 // pred_check_branch
      %63 = sbr.rel (0) target = $region33
    $region32: #{fc_discriminator_forward.1} parent=1 // pred_region
      _
    $region33: #{fc_discriminator_forward.1} parent=1 // pred_fallthru
      _
    // Predicated region
    $region34: #{fc_discriminator_forward.1} parent=1 // pred_check
      _
    $region35: #{fc_discriminator_forward.1} parent=1 // pred_check_branch
      %65 = sbr.rel (0) target = $region37
    $region36: #{fc_discriminator_forward.1} parent=1 // pred_region
      _
    $region37: #{fc_discriminator_forward.1} parent=1 // pred_fallthru
      _
    // Predicated region
    $region38: #{fc_discriminator_forward.1} parent=1 // pred_check
      _
    $region39: #{fc_discriminator_forward.1} parent=1 // pred_check_branch
      %67 = sbr.rel (0) target = $region41
    $region40: #{fc_discriminator_forward.1} parent=1 // pred_region
      %68 = dma.done [#allocation5], 32768
    $region41: #{fc_discriminator_forward.1} parent=1 // pred_fallthru
      _
    // Predicated region
    $region42: #{fc_discriminator_forward.1} parent=1 // pred_check
      _
    $region43: #{fc_discriminator_forward.1} parent=1 // pred_check_branch
      %70 = sbr.rel (0) target = $region45
    $region44: #{fc_discriminator_forward.1} parent=1 // pred_region
      %71 = dma.done [#allocation7], 8192
    $region45: #{fc_discriminator_forward.1} parent=1 // pred_fallthru
      _
    // Predicated region
    $region46: #{fc_discriminator_forward.1} parent=1 // pred_check
      _
    $region47: #{fc_discriminator_forward.1} parent=1 // pred_check_branch
      %73 = sbr.rel (0) target = $region49
    $region48: #{fc_discriminator_forward.1} parent=1 // pred_region
      %74 = dma.done [#allocation7], 4096
    $region49: #{fc_discriminator_forward.1} parent=1 // pred_fallthru
      _
    %p75 = scmp.eq.s32.totalorder 0, 0
    // Predicated region
    $region50: #{fc_discriminator_forward.1} parent=1 // pred_check
      %p76 = pneg %p75
    $region51: #{fc_discriminator_forward.1} parent=1 // pred_check_branch
      %78 = sbr.rel (%p76) target = $region53
    $region52: #{fc_discriminator_forward.1} parent=1 // pred_region
      %79 = vst [vmem:[#allocation2] sm:$0xff] 0.0
      %80 = vst [vmem:[#allocation2 + $0x8] sm:$0xff] 0.0
      %81 = vst [vmem:[#allocation2 + $0x10] sm:$0xff] 0.0
      %82 = vst [vmem:[#allocation2 + $0x18] sm:$0xff] 0.0
    $region53: #{fc_discriminator_forward.1} parent=1 // pred_fallthru
      _
    %v83 = vld [vmem:[#allocation2] sm:$0xff]
    %v84 = vld [vmem:[#allocation2 + $0x8] sm:$0xff]
    %v85 = vld [vmem:[#allocation2 + $0x10] sm:$0xff]
    %v86 = vld [vmem:[#allocation2 + $0x18] sm:$0xff]
    %v87 = vld [vmem:[%s0] sm:$0xff]
    %v88 = vld [vmem:[%s0 + $0x8] sm:$0xff]
    %v89 = vld [vmem:[%s0 + $0x10] sm:$0xff]
    %v90 = vld [vmem:[%s0 + $0x18] sm:$0xff]
    %v91 = vld [vmem:[%s0 + $0x20] sm:$0xff]
    %v92 = vld [vmem:[%s0 + $0x28] sm:$0xff]
    %v93 = vld [vmem:[%s0 + $0x30] sm:$0xff]
    %v94 = vld [vmem:[%s0 + $0x38] sm:$0xff]
    %v95 = vpack.c.bf16 %v87, %v87
    %v96 = vpack.c.bf16 %v88, %v88
    %v97 = vpack.c.bf16 %v89, %v89
    %v98 = vpack.c.bf16 %v90, %v90
    %v99 = vpack.c.bf16 %v91, %v91
    %v100 = vpack.c.bf16 %v92, %v92
    %v101 = vpack.c.bf16 %v93, %v93
    %v102 = vpack.c.bf16 %v94, %v94
    %v103 = vld [vmem:[#allocation4] sm:$0xff]
    %v104 = vld [vmem:[#allocation4 + $0x8] sm:$0xff]
    %v105 = vld [vmem:[#allocation4 + $0x10] sm:$0xff]
    %v106 = vld [vmem:[#allocation4 + $0x18] sm:$0xff]
    %v107 = vld [vmem:[#allocation4 + $0x20] sm:$0xff]
    %v108 = vld [vmem:[#allocation4 + $0x28] sm:$0xff]
    %v109 = vld [vmem:[#allocation4 + $0x30] sm:$0xff]
    %v110 = vld [vmem:[#allocation4 + $0x38] sm:$0xff]
    %v111 = vld [vmem:[#allocation4 + $0x40] sm:$0xff]
    %v112 = vld [vmem:[#allocation4 + $0x48] sm:$0xff]
    %v113 = vld [vmem:[#allocation4 + $0x50] sm:$0xff]
    %v114 = vld [vmem:[#allocation4 + $0x58] sm:$0xff]
    %v115 = vld [vmem:[#allocation4 + $0x60] sm:$0xff]
    %v116 = vld [vmem:[#allocation4 + $0x68] sm:$0xff]
    %v117 = vld [vmem:[#allocation4 + $0x70] sm:$0xff]
    %v118 = vld [vmem:[#allocation4 + $0x78] sm:$0xff]
    %v119 = vld [vmem:[#allocation4 + $0x80] sm:$0xff]
    %v120 = vld [vmem:[#allocation4 + $0x88] sm:$0xff]
    %v121 = vld [vmem:[#allocation4 + $0x90] sm:$0xff]
    %v122 = vld [vmem:[#allocation4 + $0x98] sm:$0xff]
    %v123 = vld [vmem:[#allocation4 + $0xa0] sm:$0xff]
    %v124 = vld [vmem:[#allocation4 + $0xa8] sm:$0xff]
    %v125 = vld [vmem:[#allocation4 + $0xb0] sm:$0xff]
    %v126 = vld [vmem:[#allocation4 + $0xb8] sm:$0xff]
    %v127 = vld [vmem:[#allocation4 + $0xc0] sm:$0xff]
    %v128 = vld [vmem:[#allocation4 + $0xc8] sm:$0xff]
    %v129 = vld [vmem:[#allocation4 + $0xd0] sm:$0xff]
    %v130 = vld [vmem:[#allocation4 + $0xd8] sm:$0xff]
    %v131 = vld [vmem:[#allocation4 + $0xe0] sm:$0xff]
    %v132 = vld [vmem:[#allocation4 + $0xe8] sm:$0xff]
    %v133 = vld [vmem:[#allocation4 + $0xf0] sm:$0xff]
    %v134 = vld [vmem:[#allocation4 + $0xf8] sm:$0xff]
    %v135 = vld [vmem:[#allocation4 + $0x100] sm:$0xff]
    %v136 = vld [vmem:[#allocation4 + $0x108] sm:$0xff]
    %v137 = vld [vmem:[#allocation4 + $0x110] sm:$0xff]
    %v138 = vld [vmem:[#allocation4 + $0x118] sm:$0xff]
    %v139 = vld [vmem:[#allocation4 + $0x120] sm:$0xff]
    %v140 = vld [vmem:[#allocation4 + $0x128] sm:$0xff]
    %v141 = vld [vmem:[#allocation4 + $0x130] sm:$0xff]
    %v142 = vld [vmem:[#allocation4 + $0x138] sm:$0xff]
    %v143 = vld [vmem:[#allocation4 + $0x140] sm:$0xff]
    %v144 = vld [vmem:[#allocation4 + $0x148] sm:$0xff]
    %v145 = vld [vmem:[#allocation4 + $0x150] sm:$0xff]
    %v146 = vld [vmem:[#allocation4 + $0x158] sm:$0xff]
    %v147 = vld [vmem:[#allocation4 + $0x160] sm:$0xff]
    %v148 = vld [vmem:[#allocation4 + $0x168] sm:$0xff]
    %v149 = vld [vmem:[#allocation4 + $0x170] sm:$0xff]
    %v150 = vld [vmem:[#allocation4 + $0x178] sm:$0xff]
    %v151 = vld [vmem:[#allocation4 + $0x180] sm:$0xff]
    %v152 = vld [vmem:[#allocation4 + $0x188] sm:$0xff]
    %v153 = vld [vmem:[#allocation4 + $0x190] sm:$0xff]
    %v154 = vld [vmem:[#allocation4 + $0x198] sm:$0xff]
    %v155 = vld [vmem:[#allocation4 + $0x1a0] sm:$0xff]
    %v156 = vld [vmem:[#allocation4 + $0x1a8] sm:$0xff]
    %v157 = vld [vmem:[#allocation4 + $0x1b0] sm:$0xff]
    %v158 = vld [vmem:[#allocation4 + $0x1b8] sm:$0xff]
    %v159 = vld [vmem:[#allocation4 + $0x1c0] sm:$0xff]
    %v160 = vld [vmem:[#allocation4 + $0x1c8] sm:$0xff]
    %v161 = vld [vmem:[#allocation4 + $0x1d0] sm:$0xff]
    %v162 = vld [vmem:[#allocation4 + $0x1d8] sm:$0xff]
    %v163 = vld [vmem:[#allocation4 + $0x1e0] sm:$0xff]
    %v164 = vld [vmem:[#allocation4 + $0x1e8] sm:$0xff]
    %v165 = vld [vmem:[#allocation4 + $0x1f0] sm:$0xff]
    %v166 = vld [vmem:[#allocation4 + $0x1f8] sm:$0xff]
    %v167 = vld [vmem:[#allocation4 + $0x200] sm:$0xff]
    %v168 = vld [vmem:[#allocation4 + $0x208] sm:$0xff]
    %v169 = vld [vmem:[#allocation4 + $0x210] sm:$0xff]
    %v170 = vld [vmem:[#allocation4 + $0x218] sm:$0xff]
    %v171 = vld [vmem:[#allocation4 + $0x220] sm:$0xff]
    %v172 = vld [vmem:[#allocation4 + $0x228] sm:$0xff]
    %v173 = vld [vmem:[#allocation4 + $0x230] sm:$0xff]
    %v174 = vld [vmem:[#allocation4 + $0x238] sm:$0xff]
    %v175 = vld [vmem:[#allocation4 + $0x240] sm:$0xff]
    %v176 = vld [vmem:[#allocation4 + $0x248] sm:$0xff]
    %v177 = vld [vmem:[#allocation4 + $0x250] sm:$0xff]
    %v178 = vld [vmem:[#allocation4 + $0x258] sm:$0xff]
    %v179 = vld [vmem:[#allocation4 + $0x260] sm:$0xff]
    %v180 = vld [vmem:[#allocation4 + $0x268] sm:$0xff]
    %v181 = vld [vmem:[#allocation4 + $0x270] sm:$0xff]
    %v182 = vld [vmem:[#allocation4 + $0x278] sm:$0xff]
    %v183 = vld [vmem:[#allocation4 + $0x280] sm:$0xff]
    %v184 = vld [vmem:[#allocation4 + $0x288] sm:$0xff]
    %v185 = vld [vmem:[#allocation4 + $0x290] sm:$0xff]
    %v186 = vld [vmem:[#allocation4 + $0x298] sm:$0xff]
    %v187 = vld [vmem:[#allocation4 + $0x2a0] sm:$0xff]
    %v188 = vld [vmem:[#allocation4 + $0x2a8] sm:$0xff]
    %v189 = vld [vmem:[#allocation4 + $0x2b0] sm:$0xff]
    %v190 = vld [vmem:[#allocation4 + $0x2b8] sm:$0xff]
    %v191 = vld [vmem:[#allocation4 + $0x2c0] sm:$0xff]
    %v192 = vld [vmem:[#allocation4 + $0x2c8] sm:$0xff]
    %v193 = vld [vmem:[#allocation4 + $0x2d0] sm:$0xff]
    %v194 = vld [vmem:[#allocation4 + $0x2d8] sm:$0xff]
    %v195 = vld [vmem:[#allocation4 + $0x2e0] sm:$0xff]
    %v196 = vld [vmem:[#allocation4 + $0x2e8] sm:$0xff]
    %v197 = vld [vmem:[#allocation4 + $0x2f0] sm:$0xff]
    %v198 = vld [vmem:[#allocation4 + $0x2f8] sm:$0xff]
    %v199 = vld [vmem:[#allocation4 + $0x300] sm:$0xff]
    %v200 = vld [vmem:[#allocation4 + $0x308] sm:$0xff]
    %v201 = vld [vmem:[#allocation4 + $0x310] sm:$0xff]
    %v202 = vld [vmem:[#allocation4 + $0x318] sm:$0xff]
    %v203 = vld [vmem:[#allocation4 + $0x320] sm:$0xff]
    %v204 = vld [vmem:[#allocation4 + $0x328] sm:$0xff]
    %v205 = vld [vmem:[#allocation4 + $0x330] sm:$0xff]
    %v206 = vld [vmem:[#allocation4 + $0x338] sm:$0xff]
    %v207 = vld [vmem:[#allocation4 + $0x340] sm:$0xff]
    %v208 = vld [vmem:[#allocation4 + $0x348] sm:$0xff]
    %v209 = vld [vmem:[#allocation4 + $0x350] sm:$0xff]
    %v210 = vld [vmem:[#allocation4 + $0x358] sm:$0xff]
    %v211 = vld [vmem:[#allocation4 + $0x360] sm:$0xff]
    %v212 = vld [vmem:[#allocation4 + $0x368] sm:$0xff]
    %v213 = vld [vmem:[#allocation4 + $0x370] sm:$0xff]
    %v214 = vld [vmem:[#allocation4 + $0x378] sm:$0xff]
    %v215 = vld [vmem:[#allocation4 + $0x380] sm:$0xff]
    %v216 = vld [vmem:[#allocation4 + $0x388] sm:$0xff]
    %v217 = vld [vmem:[#allocation4 + $0x390] sm:$0xff]
    %v218 = vld [vmem:[#allocation4 + $0x398] sm:$0xff]
    %v219 = vld [vmem:[#allocation4 + $0x3a0] sm:$0xff]
    %v220 = vld [vmem:[#allocation4 + $0x3a8] sm:$0xff]
    %v221 = vld [vmem:[#allocation4 + $0x3b0] sm:$0xff]
    %v222 = vld [vmem:[#allocation4 + $0x3b8] sm:$0xff]
    %v223 = vld [vmem:[#allocation4 + $0x3c0] sm:$0xff]
    %v224 = vld [vmem:[#allocation4 + $0x3c8] sm:$0xff]
    %v225 = vld [vmem:[#allocation4 + $0x3d0] sm:$0xff]
    %v226 = vld [vmem:[#allocation4 + $0x3d8] sm:$0xff]
    %v227 = vld [vmem:[#allocation4 + $0x3e0] sm:$0xff]
    %v228 = vld [vmem:[#allocation4 + $0x3e8] sm:$0xff]
    %v229 = vld [vmem:[#allocation4 + $0x3f0] sm:$0xff]
    %v230 = vld [vmem:[#allocation4 + $0x3f8] sm:$0xff]
    %v231 = vld [vmem:[#allocation4 + $0x400] sm:$0xff]
    %v232 = vld [vmem:[#allocation4 + $0x408] sm:$0xff]
    %v233 = vld [vmem:[#allocation4 + $0x410] sm:$0xff]
    %v234 = vld [vmem:[#allocation4 + $0x418] sm:$0xff]
    %v235 = vld [vmem:[#allocation4 + $0x420] sm:$0xff]
    %v236 = vld [vmem:[#allocation4 + $0x428] sm:$0xff]
    %v237 = vld [vmem:[#allocation4 + $0x430] sm:$0xff]
    %v238 = vld [vmem:[#allocation4 + $0x438] sm:$0xff]
    %v239 = vld [vmem:[#allocation4 + $0x440] sm:$0xff]
    %v240 = vld [vmem:[#allocation4 + $0x448] sm:$0xff]
    %v241 = vld [vmem:[#allocation4 + $0x450] sm:$0xff]
    %v242 = vld [vmem:[#allocation4 + $0x458] sm:$0xff]
    %v243 = vld [vmem:[#allocation4 + $0x460] sm:$0xff]
    %v244 = vld [vmem:[#allocation4 + $0x468] sm:$0xff]
    %v245 = vld [vmem:[#allocation4 + $0x470] sm:$0xff]
    %v246 = vld [vmem:[#allocation4 + $0x478] sm:$0xff]
    %v247 = vld [vmem:[#allocation4 + $0x480] sm:$0xff]
    %v248 = vld [vmem:[#allocation4 + $0x488] sm:$0xff]
    %v249 = vld [vmem:[#allocation4 + $0x490] sm:$0xff]
    %v250 = vld [vmem:[#allocation4 + $0x498] sm:$0xff]
    %v251 = vld [vmem:[#allocation4 + $0x4a0] sm:$0xff]
    %v252 = vld [vmem:[#allocation4 + $0x4a8] sm:$0xff]
    %v253 = vld [vmem:[#allocation4 + $0x4b0] sm:$0xff]
    %v254 = vld [vmem:[#allocation4 + $0x4b8] sm:$0xff]
    %v255 = vld [vmem:[#allocation4 + $0x4c0] sm:$0xff]
    %v256 = vld [vmem:[#allocation4 + $0x4c8] sm:$0xff]
    %v257 = vld [vmem:[#allocation4 + $0x4d0] sm:$0xff]
    %v258 = vld [vmem:[#allocation4 + $0x4d8] sm:$0xff]
    %v259 = vld [vmem:[#allocation4 + $0x4e0] sm:$0xff]
    %v260 = vld [vmem:[#allocation4 + $0x4e8] sm:$0xff]
    %v261 = vld [vmem:[#allocation4 + $0x4f0] sm:$0xff]
    %v262 = vld [vmem:[#allocation4 + $0x4f8] sm:$0xff]
    %v263 = vld [vmem:[#allocation4 + $0x500] sm:$0xff]
    %v264 = vld [vmem:[#allocation4 + $0x508] sm:$0xff]
    %v265 = vld [vmem:[#allocation4 + $0x510] sm:$0xff]
    %v266 = vld [vmem:[#allocation4 + $0x518] sm:$0xff]
    %v267 = vld [vmem:[#allocation4 + $0x520] sm:$0xff]
    %v268 = vld [vmem:[#allocation4 + $0x528] sm:$0xff]
    %v269 = vld [vmem:[#allocation4 + $0x530] sm:$0xff]
    %v270 = vld [vmem:[#allocation4 + $0x538] sm:$0xff]
    %v271 = vld [vmem:[#allocation4 + $0x540] sm:$0xff]
    %v272 = vld [vmem:[#allocation4 + $0x548] sm:$0xff]
    %v273 = vld [vmem:[#allocation4 + $0x550] sm:$0xff]
    %v274 = vld [vmem:[#allocation4 + $0x558] sm:$0xff]
    %v275 = vld [vmem:[#allocation4 + $0x560] sm:$0xff]
    %v276 = vld [vmem:[#allocation4 + $0x568] sm:$0xff]
    %v277 = vld [vmem:[#allocation4 + $0x570] sm:$0xff]
    %v278 = vld [vmem:[#allocation4 + $0x578] sm:$0xff]
    %v279 = vld [vmem:[#allocation4 + $0x580] sm:$0xff]
    %v280 = vld [vmem:[#allocation4 + $0x588] sm:$0xff]
    %v281 = vld [vmem:[#allocation4 + $0x590] sm:$0xff]
    %v282 = vld [vmem:[#allocation4 + $0x598] sm:$0xff]
    %v283 = vld [vmem:[#allocation4 + $0x5a0] sm:$0xff]
    %v284 = vld [vmem:[#allocation4 + $0x5a8] sm:$0xff]
    %v285 = vld [vmem:[#allocation4 + $0x5b0] sm:$0xff]
    %v286 = vld [vmem:[#allocation4 + $0x5b8] sm:$0xff]
    %v287 = vld [vmem:[#allocation4 + $0x5c0] sm:$0xff]
    %v288 = vld [vmem:[#allocation4 + $0x5c8] sm:$0xff]
    %v289 = vld [vmem:[#allocation4 + $0x5d0] sm:$0xff]
    %v290 = vld [vmem:[#allocation4 + $0x5d8] sm:$0xff]
    %v291 = vld [vmem:[#allocation4 + $0x5e0] sm:$0xff]
    %v292 = vld [vmem:[#allocation4 + $0x5e8] sm:$0xff]
    %v293 = vld [vmem:[#allocation4 + $0x5f0] sm:$0xff]
    %v294 = vld [vmem:[#allocation4 + $0x5f8] sm:$0xff]
    %v295 = vld [vmem:[#allocation4 + $0x600] sm:$0xff]
    %v296 = vld [vmem:[#allocation4 + $0x608] sm:$0xff]
    %v297 = vld [vmem:[#allocation4 + $0x610] sm:$0xff]
    %v298 = vld [vmem:[#allocation4 + $0x618] sm:$0xff]
    %v299 = vld [vmem:[#allocation4 + $0x620] sm:$0xff]
    %v300 = vld [vmem:[#allocation4 + $0x628] sm:$0xff]
    %v301 = vld [vmem:[#allocation4 + $0x630] sm:$0xff]
    %v302 = vld [vmem:[#allocation4 + $0x638] sm:$0xff]
    %v303 = vld [vmem:[#allocation4 + $0x640] sm:$0xff]
    %v304 = vld [vmem:[#allocation4 + $0x648] sm:$0xff]
    %v305 = vld [vmem:[#allocation4 + $0x650] sm:$0xff]
    %v306 = vld [vmem:[#allocation4 + $0x658] sm:$0xff]
    %v307 = vld [vmem:[#allocation4 + $0x660] sm:$0xff]
    %v308 = vld [vmem:[#allocation4 + $0x668] sm:$0xff]
    %v309 = vld [vmem:[#allocation4 + $0x670] sm:$0xff]
    %v310 = vld [vmem:[#allocation4 + $0x678] sm:$0xff]
    %v311 = vld [vmem:[#allocation4 + $0x680] sm:$0xff]
    %v312 = vld [vmem:[#allocation4 + $0x688] sm:$0xff]
    %v313 = vld [vmem:[#allocation4 + $0x690] sm:$0xff]
    %v314 = vld [vmem:[#allocation4 + $0x698] sm:$0xff]
    %v315 = vld [vmem:[#allocation4 + $0x6a0] sm:$0xff]
    %v316 = vld [vmem:[#allocation4 + $0x6a8] sm:$0xff]
    %v317 = vld [vmem:[#allocation4 + $0x6b0] sm:$0xff]
    %v318 = vld [vmem:[#allocation4 + $0x6b8] sm:$0xff]
    %v319 = vld [vmem:[#allocation4 + $0x6c0] sm:$0xff]
    %v320 = vld [vmem:[#allocation4 + $0x6c8] sm:$0xff]
    %v321 = vld [vmem:[#allocation4 + $0x6d0] sm:$0xff]
    %v322 = vld [vmem:[#allocation4 + $0x6d8] sm:$0xff]
    %v323 = vld [vmem:[#allocation4 + $0x6e0] sm:$0xff]
    %v324 = vld [vmem:[#allocation4 + $0x6e8] sm:$0xff]
    %v325 = vld [vmem:[#allocation4 + $0x6f0] sm:$0xff]
    %v326 = vld [vmem:[#allocation4 + $0x6f8] sm:$0xff]
    %v327 = vld [vmem:[#allocation4 + $0x700] sm:$0xff]
    %v328 = vld [vmem:[#allocation4 + $0x708] sm:$0xff]
    %v329 = vld [vmem:[#allocation4 + $0x710] sm:$0xff]
    %v330 = vld [vmem:[#allocation4 + $0x718] sm:$0xff]
    %v331 = vld [vmem:[#allocation4 + $0x720] sm:$0xff]
    %v332 = vld [vmem:[#allocation4 + $0x728] sm:$0xff]
    %v333 = vld [vmem:[#allocation4 + $0x730] sm:$0xff]
    %v334 = vld [vmem:[#allocation4 + $0x738] sm:$0xff]
    %v335 = vld [vmem:[#allocation4 + $0x740] sm:$0xff]
    %v336 = vld [vmem:[#allocation4 + $0x748] sm:$0xff]
    %v337 = vld [vmem:[#allocation4 + $0x750] sm:$0xff]
    %v338 = vld [vmem:[#allocation4 + $0x758] sm:$0xff]
    %v339 = vld [vmem:[#allocation4 + $0x760] sm:$0xff]
    %v340 = vld [vmem:[#allocation4 + $0x768] sm:$0xff]
    %v341 = vld [vmem:[#allocation4 + $0x770] sm:$0xff]
    %v342 = vld [vmem:[#allocation4 + $0x778] sm:$0xff]
    %v343 = vld [vmem:[#allocation4 + $0x780] sm:$0xff]
    %v344 = vld [vmem:[#allocation4 + $0x788] sm:$0xff]
    %v345 = vld [vmem:[#allocation4 + $0x790] sm:$0xff]
    %v346 = vld [vmem:[#allocation4 + $0x798] sm:$0xff]
    %v347 = vld [vmem:[#allocation4 + $0x7a0] sm:$0xff]
    %v348 = vld [vmem:[#allocation4 + $0x7a8] sm:$0xff]
    %v349 = vld [vmem:[#allocation4 + $0x7b0] sm:$0xff]
    %v350 = vld [vmem:[#allocation4 + $0x7b8] sm:$0xff]
    %v351 = vld [vmem:[#allocation4 + $0x7c0] sm:$0xff]
    %v352 = vld [vmem:[#allocation4 + $0x7c8] sm:$0xff]
    %v353 = vld [vmem:[#allocation4 + $0x7d0] sm:$0xff]
    %v354 = vld [vmem:[#allocation4 + $0x7d8] sm:$0xff]
    %v355 = vld [vmem:[#allocation4 + $0x7e0] sm:$0xff]
    %v356 = vld [vmem:[#allocation4 + $0x7e8] sm:$0xff]
    %v357 = vld [vmem:[#allocation4 + $0x7f0] sm:$0xff]
    %v358 = vld [vmem:[#allocation4 + $0x7f8] sm:$0xff]
    %v615 = vunpack.c.l.b16 %v103
    %v616 = vunpack.c.h.b16 %v103
    %v617 = vunpack.c.l.b16 %v104
    %v618 = vunpack.c.h.b16 %v104
    %v619 = vunpack.c.l.b16 %v105
    %v620 = vunpack.c.h.b16 %v105
    %v621 = vunpack.c.l.b16 %v106
    %v622 = vunpack.c.h.b16 %v106
    %v623 = vunpack.c.l.b16 %v107
    %v624 = vunpack.c.h.b16 %v107
    %v625 = vunpack.c.l.b16 %v108
    %v626 = vunpack.c.h.b16 %v108
    %v627 = vunpack.c.l.b16 %v109
    %v628 = vunpack.c.h.b16 %v109
    %v629 = vunpack.c.l.b16 %v110
    %v630 = vunpack.c.h.b16 %v110
    %v631 = vunpack.c.l.b16 %v111
    %v632 = vunpack.c.h.b16 %v111
    %v633 = vunpack.c.l.b16 %v112
    %v634 = vunpack.c.h.b16 %v112
    %v635 = vunpack.c.l.b16 %v113
    %v636 = vunpack.c.h.b16 %v113
    %v637 = vunpack.c.l.b16 %v114
    %v638 = vunpack.c.h.b16 %v114
    %v639 = vunpack.c.l.b16 %v115
    %v640 = vunpack.c.h.b16 %v115
    %v641 = vunpack.c.l.b16 %v116
    %v642 = vunpack.c.h.b16 %v116
    %v643 = vunpack.c.l.b16 %v117
    %v644 = vunpack.c.h.b16 %v117
    %v645 = vunpack.c.l.b16 %v118
    %v646 = vunpack.c.h.b16 %v118
    %v647 = vunpack.c.l.b16 %v119
    %v648 = vunpack.c.h.b16 %v119
    %v649 = vunpack.c.l.b16 %v120
    %v650 = vunpack.c.h.b16 %v120
    %v651 = vunpack.c.l.b16 %v121
    %v652 = vunpack.c.h.b16 %v121
    %v653 = vunpack.c.l.b16 %v122
    %v654 = vunpack.c.h.b16 %v122
    %v655 = vunpack.c.l.b16 %v123
    %v656 = vunpack.c.h.b16 %v123
    %v657 = vunpack.c.l.b16 %v124
    %v658 = vunpack.c.h.b16 %v124
    %v659 = vunpack.c.l.b16 %v125
    %v660 = vunpack.c.h.b16 %v125
    %v661 = vunpack.c.l.b16 %v126
    %v662 = vunpack.c.h.b16 %v126
    %v663 = vunpack.c.l.b16 %v127
    %v664 = vunpack.c.h.b16 %v127
    %v665 = vunpack.c.l.b16 %v128
    %v666 = vunpack.c.h.b16 %v128
    %v667 = vunpack.c.l.b16 %v129
    %v668 = vunpack.c.h.b16 %v129
    %v669 = vunpack.c.l.b16 %v130
    %v670 = vunpack.c.h.b16 %v130
    %v671 = vunpack.c.l.b16 %v131
    %v672 = vunpack.c.h.b16 %v131
    %v673 = vunpack.c.l.b16 %v132
    %v674 = vunpack.c.h.b16 %v132
    %v675 = vunpack.c.l.b16 %v133
    %v676 = vunpack.c.h.b16 %v133
    %v677 = vunpack.c.l.b16 %v134
    %v678 = vunpack.c.h.b16 %v134
    %v679 = vunpack.c.l.b16 %v135
    %v680 = vunpack.c.h.b16 %v135
    %v681 = vunpack.c.l.b16 %v136
    %v682 = vunpack.c.h.b16 %v136
    %v683 = vunpack.c.l.b16 %v137
    %v684 = vunpack.c.h.b16 %v137
    %v685 = vunpack.c.l.b16 %v138
    %v686 = vunpack.c.h.b16 %v138
    %v687 = vunpack.c.l.b16 %v139
    %v688 = vunpack.c.h.b16 %v139
    %v689 = vunpack.c.l.b16 %v140
    %v690 = vunpack.c.h.b16 %v140
    %v691 = vunpack.c.l.b16 %v141
    %v692 = vunpack.c.h.b16 %v141
    %v693 = vunpack.c.l.b16 %v142
    %v694 = vunpack.c.h.b16 %v142
    %v695 = vunpack.c.l.b16 %v143
    %v696 = vunpack.c.h.b16 %v143
    %v697 = vunpack.c.l.b16 %v144
    %v698 = vunpack.c.h.b16 %v144
    %v699 = vunpack.c.l.b16 %v145
    %v700 = vunpack.c.h.b16 %v145
    %v701 = vunpack.c.l.b16 %v146
    %v702 = vunpack.c.h.b16 %v146
    %v703 = vunpack.c.l.b16 %v147
    %v704 = vunpack.c.h.b16 %v147
    %v705 = vunpack.c.l.b16 %v148
    %v706 = vunpack.c.h.b16 %v148
    %v707 = vunpack.c.l.b16 %v149
    %v708 = vunpack.c.h.b16 %v149
    %v709 = vunpack.c.l.b16 %v150
    %v710 = vunpack.c.h.b16 %v150
    %v711 = vunpack.c.l.b16 %v151
    %v712 = vunpack.c.h.b16 %v151
    %v713 = vunpack.c.l.b16 %v152
    %v714 = vunpack.c.h.b16 %v152
    %v715 = vunpack.c.l.b16 %v153
    %v716 = vunpack.c.h.b16 %v153
    %v717 = vunpack.c.l.b16 %v154
    %v718 = vunpack.c.h.b16 %v154
    %v719 = vunpack.c.l.b16 %v155
    %v720 = vunpack.c.h.b16 %v155
    %v721 = vunpack.c.l.b16 %v156
    %v722 = vunpack.c.h.b16 %v156
    %v723 = vunpack.c.l.b16 %v157
    %v724 = vunpack.c.h.b16 %v157
    %v725 = vunpack.c.l.b16 %v158
    %v726 = vunpack.c.h.b16 %v158
    %v727 = vunpack.c.l.b16 %v159
    %v728 = vunpack.c.h.b16 %v159
    %v729 = vunpack.c.l.b16 %v160
    %v730 = vunpack.c.h.b16 %v160
    %v731 = vunpack.c.l.b16 %v161
    %v732 = vunpack.c.h.b16 %v161
    %v733 = vunpack.c.l.b16 %v162
    %v734 = vunpack.c.h.b16 %v162
    %v735 = vunpack.c.l.b16 %v163
    %v736 = vunpack.c.h.b16 %v163
    %v737 = vunpack.c.l.b16 %v164
    %v738 = vunpack.c.h.b16 %v164
    %v739 = vunpack.c.l.b16 %v165
    %v740 = vunpack.c.h.b16 %v165
    %v741 = vunpack.c.l.b16 %v166
    %v742 = vunpack.c.h.b16 %v166
    %v743 = vunpack.c.l.b16 %v167
    %v744 = vunpack.c.h.b16 %v167
    %v745 = vunpack.c.l.b16 %v168
    %v746 = vunpack.c.h.b16 %v168
    %v747 = vunpack.c.l.b16 %v169
    %v748 = vunpack.c.h.b16 %v169
    %v749 = vunpack.c.l.b16 %v170
    %v750 = vunpack.c.h.b16 %v170
    %v751 = vunpack.c.l.b16 %v171
    %v752 = vunpack.c.h.b16 %v171
    %v753 = vunpack.c.l.b16 %v172
    %v754 = vunpack.c.h.b16 %v172
    %v755 = vunpack.c.l.b16 %v173
    %v756 = vunpack.c.h.b16 %v173
    %v757 = vunpack.c.l.b16 %v174
    %v758 = vunpack.c.h.b16 %v174
    %v759 = vunpack.c.l.b16 %v175
    %v760 = vunpack.c.h.b16 %v175
    %v761 = vunpack.c.l.b16 %v176
    %v762 = vunpack.c.h.b16 %v176
    %v763 = vunpack.c.l.b16 %v177
    %v764 = vunpack.c.h.b16 %v177
    %v765 = vunpack.c.l.b16 %v178
    %v766 = vunpack.c.h.b16 %v178
    %v767 = vunpack.c.l.b16 %v179
    %v768 = vunpack.c.h.b16 %v179
    %v769 = vunpack.c.l.b16 %v180
    %v770 = vunpack.c.h.b16 %v180
    %v771 = vunpack.c.l.b16 %v181
    %v772 = vunpack.c.h.b16 %v181
    %v773 = vunpack.c.l.b16 %v182
    %v774 = vunpack.c.h.b16 %v182
    %v775 = vunpack.c.l.b16 %v183
    %v776 = vunpack.c.h.b16 %v183
    %v777 = vunpack.c.l.b16 %v184
    %v778 = vunpack.c.h.b16 %v184
    %v779 = vunpack.c.l.b16 %v185
    %v780 = vunpack.c.h.b16 %v185
    %v781 = vunpack.c.l.b16 %v186
    %v782 = vunpack.c.h.b16 %v186
    %v783 = vunpack.c.l.b16 %v187
    %v784 = vunpack.c.h.b16 %v187
    %v785 = vunpack.c.l.b16 %v188
    %v786 = vunpack.c.h.b16 %v188
    %v787 = vunpack.c.l.b16 %v189
    %v788 = vunpack.c.h.b16 %v189
    %v789 = vunpack.c.l.b16 %v190
    %v790 = vunpack.c.h.b16 %v190
    %v791 = vunpack.c.l.b16 %v191
    %v792 = vunpack.c.h.b16 %v191
    %v793 = vunpack.c.l.b16 %v192
    %v794 = vunpack.c.h.b16 %v192
    %v795 = vunpack.c.l.b16 %v193
    %v796 = vunpack.c.h.b16 %v193
    %v797 = vunpack.c.l.b16 %v194
    %v798 = vunpack.c.h.b16 %v194
    %v799 = vunpack.c.l.b16 %v195
    %v800 = vunpack.c.h.b16 %v195
    %v801 = vunpack.c.l.b16 %v196
    %v802 = vunpack.c.h.b16 %v196
    %v803 = vunpack.c.l.b16 %v197
    %v804 = vunpack.c.h.b16 %v197
    %v805 = vunpack.c.l.b16 %v198
    %v806 = vunpack.c.h.b16 %v198
    %v807 = vunpack.c.l.b16 %v199
    %v808 = vunpack.c.h.b16 %v199
    %v809 = vunpack.c.l.b16 %v200
    %v810 = vunpack.c.h.b16 %v200
    %v811 = vunpack.c.l.b16 %v201
    %v812 = vunpack.c.h.b16 %v201
    %v813 = vunpack.c.l.b16 %v202
    %v814 = vunpack.c.h.b16 %v202
    %v815 = vunpack.c.l.b16 %v203
    %v816 = vunpack.c.h.b16 %v203
    %v817 = vunpack.c.l.b16 %v204
    %v818 = vunpack.c.h.b16 %v204
    %v819 = vunpack.c.l.b16 %v205
    %v820 = vunpack.c.h.b16 %v205
    %v821 = vunpack.c.l.b16 %v206
    %v822 = vunpack.c.h.b16 %v206
    %v823 = vunpack.c.l.b16 %v207
    %v824 = vunpack.c.h.b16 %v207
    %v825 = vunpack.c.l.b16 %v208
    %v826 = vunpack.c.h.b16 %v208
    %v827 = vunpack.c.l.b16 %v209
    %v828 = vunpack.c.h.b16 %v209
    %v829 = vunpack.c.l.b16 %v210
    %v830 = vunpack.c.h.b16 %v210
    %v831 = vunpack.c.l.b16 %v211
    %v832 = vunpack.c.h.b16 %v211
    %v833 = vunpack.c.l.b16 %v212
    %v834 = vunpack.c.h.b16 %v212
    %v835 = vunpack.c.l.b16 %v213
    %v836 = vunpack.c.h.b16 %v213
    %v837 = vunpack.c.l.b16 %v214
    %v838 = vunpack.c.h.b16 %v214
    %v839 = vunpack.c.l.b16 %v215
    %v840 = vunpack.c.h.b16 %v215
    %v841 = vunpack.c.l.b16 %v216
    %v842 = vunpack.c.h.b16 %v216
    %v843 = vunpack.c.l.b16 %v217
    %v844 = vunpack.c.h.b16 %v217
    %v845 = vunpack.c.l.b16 %v218
    %v846 = vunpack.c.h.b16 %v218
    %v847 = vunpack.c.l.b16 %v219
    %v848 = vunpack.c.h.b16 %v219
    %v849 = vunpack.c.l.b16 %v220
    %v850 = vunpack.c.h.b16 %v220
    %v851 = vunpack.c.l.b16 %v221
    %v852 = vunpack.c.h.b16 %v221
    %v853 = vunpack.c.l.b16 %v222
    %v854 = vunpack.c.h.b16 %v222
    %v855 = vunpack.c.l.b16 %v223
    %v856 = vunpack.c.h.b16 %v223
    %v857 = vunpack.c.l.b16 %v224
    %v858 = vunpack.c.h.b16 %v224
    %v859 = vunpack.c.l.b16 %v225
    %v860 = vunpack.c.h.b16 %v225
    %v861 = vunpack.c.l.b16 %v226
    %v862 = vunpack.c.h.b16 %v226
    %v863 = vunpack.c.l.b16 %v227
    %v864 = vunpack.c.h.b16 %v227
    %v865 = vunpack.c.l.b16 %v228
    %v866 = vunpack.c.h.b16 %v228
    %v867 = vunpack.c.l.b16 %v229
    %v868 = vunpack.c.h.b16 %v229
    %v869 = vunpack.c.l.b16 %v230
    %v870 = vunpack.c.h.b16 %v230
    %v871 = vunpack.c.l.b16 %v231
    %v872 = vunpack.c.h.b16 %v231
    %v873 = vunpack.c.l.b16 %v232
    %v874 = vunpack.c.h.b16 %v232
    %v875 = vunpack.c.l.b16 %v233
    %v876 = vunpack.c.h.b16 %v233
    %v877 = vunpack.c.l.b16 %v234
    %v878 = vunpack.c.h.b16 %v234
    %v879 = vunpack.c.l.b16 %v235
    %v880 = vunpack.c.h.b16 %v235
    %v881 = vunpack.c.l.b16 %v236
    %v882 = vunpack.c.h.b16 %v236
    %v883 = vunpack.c.l.b16 %v237
    %v884 = vunpack.c.h.b16 %v237
    %v885 = vunpack.c.l.b16 %v238
    %v886 = vunpack.c.h.b16 %v238
    %v887 = vunpack.c.l.b16 %v239
    %v888 = vunpack.c.h.b16 %v239
    %v889 = vunpack.c.l.b16 %v240
    %v890 = vunpack.c.h.b16 %v240
    %v891 = vunpack.c.l.b16 %v241
    %v892 = vunpack.c.h.b16 %v241
    %v893 = vunpack.c.l.b16 %v242
    %v894 = vunpack.c.h.b16 %v242
    %v895 = vunpack.c.l.b16 %v243
    %v896 = vunpack.c.h.b16 %v243
    %v897 = vunpack.c.l.b16 %v244
    %v898 = vunpack.c.h.b16 %v244
    %v899 = vunpack.c.l.b16 %v245
    %v900 = vunpack.c.h.b16 %v245
    %v901 = vunpack.c.l.b16 %v246
    %v902 = vunpack.c.h.b16 %v246
    %v903 = vunpack.c.l.b16 %v247
    %v904 = vunpack.c.h.b16 %v247
    %v905 = vunpack.c.l.b16 %v248
    %v906 = vunpack.c.h.b16 %v248
    %v907 = vunpack.c.l.b16 %v249
    %v908 = vunpack.c.h.b16 %v249
    %v909 = vunpack.c.l.b16 %v250
    %v910 = vunpack.c.h.b16 %v250
    %v911 = vunpack.c.l.b16 %v251
    %v912 = vunpack.c.h.b16 %v251
    %v913 = vunpack.c.l.b16 %v252
    %v914 = vunpack.c.h.b16 %v252
    %v915 = vunpack.c.l.b16 %v253
    %v916 = vunpack.c.h.b16 %v253
    %v917 = vunpack.c.l.b16 %v254
    %v918 = vunpack.c.h.b16 %v254
    %v919 = vunpack.c.l.b16 %v255
    %v920 = vunpack.c.h.b16 %v255
    %v921 = vunpack.c.l.b16 %v256
    %v922 = vunpack.c.h.b16 %v256
    %v923 = vunpack.c.l.b16 %v257
    %v924 = vunpack.c.h.b16 %v257
    %v925 = vunpack.c.l.b16 %v258
    %v926 = vunpack.c.h.b16 %v258
    %v927 = vunpack.c.l.b16 %v259
    %v928 = vunpack.c.h.b16 %v259
    %v929 = vunpack.c.l.b16 %v260
    %v930 = vunpack.c.h.b16 %v260
    %v931 = vunpack.c.l.b16 %v261
    %v932 = vunpack.c.h.b16 %v261
    %v933 = vunpack.c.l.b16 %v262
    %v934 = vunpack.c.h.b16 %v262
    %v935 = vunpack.c.l.b16 %v263
    %v936 = vunpack.c.h.b16 %v263
    %v937 = vunpack.c.l.b16 %v264
    %v938 = vunpack.c.h.b16 %v264
    %v939 = vunpack.c.l.b16 %v265
    %v940 = vunpack.c.h.b16 %v265
    %v941 = vunpack.c.l.b16 %v266
    %v942 = vunpack.c.h.b16 %v266
    %v943 = vunpack.c.l.b16 %v267
    %v944 = vunpack.c.h.b16 %v267
    %v945 = vunpack.c.l.b16 %v268
    %v946 = vunpack.c.h.b16 %v268
    %v947 = vunpack.c.l.b16 %v269
    %v948 = vunpack.c.h.b16 %v269
    %v949 = vunpack.c.l.b16 %v270
    %v950 = vunpack.c.h.b16 %v270
    %v951 = vunpack.c.l.b16 %v271
    %v952 = vunpack.c.h.b16 %v271
    %v953 = vunpack.c.l.b16 %v272
    %v954 = vunpack.c.h.b16 %v272
    %v955 = vunpack.c.l.b16 %v273
    %v956 = vunpack.c.h.b16 %v273
    %v957 = vunpack.c.l.b16 %v274
    %v958 = vunpack.c.h.b16 %v274
    %v959 = vunpack.c.l.b16 %v275
    %v960 = vunpack.c.h.b16 %v275
    %v961 = vunpack.c.l.b16 %v276
    %v962 = vunpack.c.h.b16 %v276
    %v963 = vunpack.c.l.b16 %v277
    %v964 = vunpack.c.h.b16 %v277
    %v965 = vunpack.c.l.b16 %v278
    %v966 = vunpack.c.h.b16 %v278
    %v967 = vunpack.c.l.b16 %v279
    %v968 = vunpack.c.h.b16 %v279
    %v969 = vunpack.c.l.b16 %v280
    %v970 = vunpack.c.h.b16 %v280
    %v971 = vunpack.c.l.b16 %v281
    %v972 = vunpack.c.h.b16 %v281
    %v973 = vunpack.c.l.b16 %v282
    %v974 = vunpack.c.h.b16 %v282
    %v975 = vunpack.c.l.b16 %v283
    %v976 = vunpack.c.h.b16 %v283
    %v977 = vunpack.c.l.b16 %v284
    %v978 = vunpack.c.h.b16 %v284
    %v979 = vunpack.c.l.b16 %v285
    %v980 = vunpack.c.h.b16 %v285
    %v981 = vunpack.c.l.b16 %v286
    %v982 = vunpack.c.h.b16 %v286
    %v983 = vunpack.c.l.b16 %v287
    %v984 = vunpack.c.h.b16 %v287
    %v985 = vunpack.c.l.b16 %v288
    %v986 = vunpack.c.h.b16 %v288
    %v987 = vunpack.c.l.b16 %v289
    %v988 = vunpack.c.h.b16 %v289
    %v989 = vunpack.c.l.b16 %v290
    %v990 = vunpack.c.h.b16 %v290
    %v991 = vunpack.c.l.b16 %v291
    %v992 = vunpack.c.h.b16 %v291
    %v993 = vunpack.c.l.b16 %v292
    %v994 = vunpack.c.h.b16 %v292
    %v995 = vunpack.c.l.b16 %v293
    %v996 = vunpack.c.h.b16 %v293
    %v997 = vunpack.c.l.b16 %v294
    %v998 = vunpack.c.h.b16 %v294
    %v999 = vunpack.c.l.b16 %v295
    %v1000 = vunpack.c.h.b16 %v295
    %v1001 = vunpack.c.l.b16 %v296
    %v1002 = vunpack.c.h.b16 %v296
    %v1003 = vunpack.c.l.b16 %v297
    %v1004 = vunpack.c.h.b16 %v297
    %v1005 = vunpack.c.l.b16 %v298
    %v1006 = vunpack.c.h.b16 %v298
    %v1007 = vunpack.c.l.b16 %v299
    %v1008 = vunpack.c.h.b16 %v299
    %v1009 = vunpack.c.l.b16 %v300
    %v1010 = vunpack.c.h.b16 %v300
    %v1011 = vunpack.c.l.b16 %v301
    %v1012 = vunpack.c.h.b16 %v301
    %v1013 = vunpack.c.l.b16 %v302
    %v1014 = vunpack.c.h.b16 %v302
    %v1015 = vunpack.c.l.b16 %v303
    %v1016 = vunpack.c.h.b16 %v303
    %v1017 = vunpack.c.l.b16 %v304
    %v1018 = vunpack.c.h.b16 %v304
    %v1019 = vunpack.c.l.b16 %v305
    %v1020 = vunpack.c.h.b16 %v305
    %v1021 = vunpack.c.l.b16 %v306
    %v1022 = vunpack.c.h.b16 %v306
    %v1023 = vunpack.c.l.b16 %v307
    %v1024 = vunpack.c.h.b16 %v307
    %v1025 = vunpack.c.l.b16 %v308
    %v1026 = vunpack.c.h.b16 %v308
    %v1027 = vunpack.c.l.b16 %v309
    %v1028 = vunpack.c.h.b16 %v309
    %v1029 = vunpack.c.l.b16 %v310
    %v1030 = vunpack.c.h.b16 %v310
    %v1031 = vunpack.c.l.b16 %v311
    %v1032 = vunpack.c.h.b16 %v311
    %v1033 = vunpack.c.l.b16 %v312
    %v1034 = vunpack.c.h.b16 %v312
    %v1035 = vunpack.c.l.b16 %v313
    %v1036 = vunpack.c.h.b16 %v313
    %v1037 = vunpack.c.l.b16 %v314
    %v1038 = vunpack.c.h.b16 %v314
    %v1039 = vunpack.c.l.b16 %v315
    %v1040 = vunpack.c.h.b16 %v315
    %v1041 = vunpack.c.l.b16 %v316
    %v1042 = vunpack.c.h.b16 %v316
    %v1043 = vunpack.c.l.b16 %v317
    %v1044 = vunpack.c.h.b16 %v317
    %v1045 = vunpack.c.l.b16 %v318
    %v1046 = vunpack.c.h.b16 %v318
    %v1047 = vunpack.c.l.b16 %v319
    %v1048 = vunpack.c.h.b16 %v319
    %v1049 = vunpack.c.l.b16 %v320
    %v1050 = vunpack.c.h.b16 %v320
    %v1051 = vunpack.c.l.b16 %v321
    %v1052 = vunpack.c.h.b16 %v321
    %v1053 = vunpack.c.l.b16 %v322
    %v1054 = vunpack.c.h.b16 %v322
    %v1055 = vunpack.c.l.b16 %v323
    %v1056 = vunpack.c.h.b16 %v323
    %v1057 = vunpack.c.l.b16 %v324
    %v1058 = vunpack.c.h.b16 %v324
    %v1059 = vunpack.c.l.b16 %v325
    %v1060 = vunpack.c.h.b16 %v325
    %v1061 = vunpack.c.l.b16 %v326
    %v1062 = vunpack.c.h.b16 %v326
    %v1063 = vunpack.c.l.b16 %v327
    %v1064 = vunpack.c.h.b16 %v327
    %v1065 = vunpack.c.l.b16 %v328
    %v1066 = vunpack.c.h.b16 %v328
    %v1067 = vunpack.c.l.b16 %v329
    %v1068 = vunpack.c.h.b16 %v329
    %v1069 = vunpack.c.l.b16 %v330
    %v1070 = vunpack.c.h.b16 %v330
    %v1071 = vunpack.c.l.b16 %v331
    %v1072 = vunpack.c.h.b16 %v331
    %v1073 = vunpack.c.l.b16 %v332
    %v1074 = vunpack.c.h.b16 %v332
    %v1075 = vunpack.c.l.b16 %v333
    %v1076 = vunpack.c.h.b16 %v333
    %v1077 = vunpack.c.l.b16 %v334
    %v1078 = vunpack.c.h.b16 %v334
    %v1079 = vunpack.c.l.b16 %v335
    %v1080 = vunpack.c.h.b16 %v335
    %v1081 = vunpack.c.l.b16 %v336
    %v1082 = vunpack.c.h.b16 %v336
    %v1083 = vunpack.c.l.b16 %v337
    %v1084 = vunpack.c.h.b16 %v337
    %v1085 = vunpack.c.l.b16 %v338
    %v1086 = vunpack.c.h.b16 %v338
    %v1087 = vunpack.c.l.b16 %v339
    %v1088 = vunpack.c.h.b16 %v339
    %v1089 = vunpack.c.l.b16 %v340
    %v1090 = vunpack.c.h.b16 %v340
    %v1091 = vunpack.c.l.b16 %v341
    %v1092 = vunpack.c.h.b16 %v341
    %v1093 = vunpack.c.l.b16 %v342
    %v1094 = vunpack.c.h.b16 %v342
    %v1095 = vunpack.c.l.b16 %v343
    %v1096 = vunpack.c.h.b16 %v343
    %v1097 = vunpack.c.l.b16 %v344
    %v1098 = vunpack.c.h.b16 %v344
    %v1099 = vunpack.c.l.b16 %v345
    %v1100 = vunpack.c.h.b16 %v345
    %v1101 = vunpack.c.l.b16 %v346
    %v1102 = vunpack.c.h.b16 %v346
    %v1103 = vunpack.c.l.b16 %v347
    %v1104 = vunpack.c.h.b16 %v347
    %v1105 = vunpack.c.l.b16 %v348
    %v1106 = vunpack.c.h.b16 %v348
    %v1107 = vunpack.c.l.b16 %v349
    %v1108 = vunpack.c.h.b16 %v349
    %v1109 = vunpack.c.l.b16 %v350
    %v1110 = vunpack.c.h.b16 %v350
    %v1111 = vunpack.c.l.b16 %v351
    %v1112 = vunpack.c.h.b16 %v351
    %v1113 = vunpack.c.l.b16 %v352
    %v1114 = vunpack.c.h.b16 %v352
    %v1115 = vunpack.c.l.b16 %v353
    %v1116 = vunpack.c.h.b16 %v353
    %v1117 = vunpack.c.l.b16 %v354
    %v1118 = vunpack.c.h.b16 %v354
    %v1119 = vunpack.c.l.b16 %v355
    %v1120 = vunpack.c.h.b16 %v355
    %v1121 = vunpack.c.l.b16 %v356
    %v1122 = vunpack.c.h.b16 %v356
    %v1123 = vunpack.c.l.b16 %v357
    %v1124 = vunpack.c.h.b16 %v357
    %v1125 = vunpack.c.l.b16 %v358
    %v1126 = vunpack.c.h.b16 %v358
    %v1127 = vpack.c.b16 %v619, %v615
    %v1128 = vpack.c.b16 %v620, %v616
    %v1129 = vpack.c.b16 %v621, %v617
    %v1130 = vpack.c.b16 %v622, %v618
    %v1131 = vpack.c.b16 %v627, %v623
    %v1132 = vpack.c.b16 %v628, %v624
    %v1133 = vpack.c.b16 %v629, %v625
    %v1134 = vpack.c.b16 %v630, %v626
    %v1135 = vpack.c.b16 %v635, %v631
    %v1136 = vpack.c.b16 %v636, %v632
    %v1137 = vpack.c.b16 %v637, %v633
    %v1138 = vpack.c.b16 %v638, %v634
    %v1139 = vpack.c.b16 %v643, %v639
    %v1140 = vpack.c.b16 %v644, %v640
    %v1141 = vpack.c.b16 %v645, %v641
    %v1142 = vpack.c.b16 %v646, %v642
    %v1143 = vpack.c.b16 %v651, %v647
    %v1144 = vpack.c.b16 %v652, %v648
    %v1145 = vpack.c.b16 %v653, %v649
    %v1146 = vpack.c.b16 %v654, %v650
    %v1147 = vpack.c.b16 %v659, %v655
    %v1148 = vpack.c.b16 %v660, %v656
    %v1149 = vpack.c.b16 %v661, %v657
    %v1150 = vpack.c.b16 %v662, %v658
    %v1151 = vpack.c.b16 %v667, %v663
    %v1152 = vpack.c.b16 %v668, %v664
    %v1153 = vpack.c.b16 %v669, %v665
    %v1154 = vpack.c.b16 %v670, %v666
    %v1155 = vpack.c.b16 %v675, %v671
    %v1156 = vpack.c.b16 %v676, %v672
    %v1157 = vpack.c.b16 %v677, %v673
    %v1158 = vpack.c.b16 %v678, %v674
    %v1159 = vpack.c.b16 %v683, %v679
    %v1160 = vpack.c.b16 %v684, %v680
    %v1161 = vpack.c.b16 %v685, %v681
    %v1162 = vpack.c.b16 %v686, %v682
    %v1163 = vpack.c.b16 %v691, %v687
    %v1164 = vpack.c.b16 %v692, %v688
    %v1165 = vpack.c.b16 %v693, %v689
    %v1166 = vpack.c.b16 %v694, %v690
    %v1167 = vpack.c.b16 %v699, %v695
    %v1168 = vpack.c.b16 %v700, %v696
    %v1169 = vpack.c.b16 %v701, %v697
    %v1170 = vpack.c.b16 %v702, %v698
    %v1171 = vpack.c.b16 %v707, %v703
    %v1172 = vpack.c.b16 %v708, %v704
    %v1173 = vpack.c.b16 %v709, %v705
    %v1174 = vpack.c.b16 %v710, %v706
    %v1175 = vpack.c.b16 %v715, %v711
    %v1176 = vpack.c.b16 %v716, %v712
    %v1177 = vpack.c.b16 %v717, %v713
    %v1178 = vpack.c.b16 %v718, %v714
    %v1179 = vpack.c.b16 %v723, %v719
    %v1180 = vpack.c.b16 %v724, %v720
    %v1181 = vpack.c.b16 %v725, %v721
    %v1182 = vpack.c.b16 %v726, %v722
    %v1183 = vpack.c.b16 %v731, %v727
    %v1184 = vpack.c.b16 %v732, %v728
    %v1185 = vpack.c.b16 %v733, %v729
    %v1186 = vpack.c.b16 %v734, %v730
    %v1187 = vpack.c.b16 %v739, %v735
    %v1188 = vpack.c.b16 %v740, %v736
    %v1189 = vpack.c.b16 %v741, %v737
    %v1190 = vpack.c.b16 %v742, %v738
    %v1191 = vpack.c.b16 %v747, %v743
    %v1192 = vpack.c.b16 %v748, %v744
    %v1193 = vpack.c.b16 %v749, %v745
    %v1194 = vpack.c.b16 %v750, %v746
    %v1195 = vpack.c.b16 %v755, %v751
    %v1196 = vpack.c.b16 %v756, %v752
    %v1197 = vpack.c.b16 %v757, %v753
    %v1198 = vpack.c.b16 %v758, %v754
    %v1199 = vpack.c.b16 %v763, %v759
    %v1200 = vpack.c.b16 %v764, %v760
    %v1201 = vpack.c.b16 %v765, %v761
    %v1202 = vpack.c.b16 %v766, %v762
    %v1203 = vpack.c.b16 %v771, %v767
    %v1204 = vpack.c.b16 %v772, %v768
    %v1205 = vpack.c.b16 %v773, %v769
    %v1206 = vpack.c.b16 %v774, %v770
    %v1207 = vpack.c.b16 %v779, %v775
    %v1208 = vpack.c.b16 %v780, %v776
    %v1209 = vpack.c.b16 %v781, %v777
    %v1210 = vpack.c.b16 %v782, %v778
    %v1211 = vpack.c.b16 %v787, %v783
    %v1212 = vpack.c.b16 %v788, %v784
    %v1213 = vpack.c.b16 %v789, %v785
    %v1214 = vpack.c.b16 %v790, %v786
    %v1215 = vpack.c.b16 %v795, %v791
    %v1216 = vpack.c.b16 %v796, %v792
    %v1217 = vpack.c.b16 %v797, %v793
    %v1218 = vpack.c.b16 %v798, %v794
    %v1219 = vpack.c.b16 %v803, %v799
    %v1220 = vpack.c.b16 %v804, %v800
    %v1221 = vpack.c.b16 %v805, %v801
    %v1222 = vpack.c.b16 %v806, %v802
    %v1223 = vpack.c.b16 %v811, %v807
    %v1224 = vpack.c.b16 %v812, %v808
    %v1225 = vpack.c.b16 %v813, %v809
    %v1226 = vpack.c.b16 %v814, %v810
    %v1227 = vpack.c.b16 %v819, %v815
    %v1228 = vpack.c.b16 %v820, %v816
    %v1229 = vpack.c.b16 %v821, %v817
    %v1230 = vpack.c.b16 %v822, %v818
    %v1231 = vpack.c.b16 %v827, %v823
    %v1232 = vpack.c.b16 %v828, %v824
    %v1233 = vpack.c.b16 %v829, %v825
    %v1234 = vpack.c.b16 %v830, %v826
    %v1235 = vpack.c.b16 %v835, %v831
    %v1236 = vpack.c.b16 %v836, %v832
    %v1237 = vpack.c.b16 %v837, %v833
    %v1238 = vpack.c.b16 %v838, %v834
    %v1239 = vpack.c.b16 %v843, %v839
    %v1240 = vpack.c.b16 %v844, %v840
    %v1241 = vpack.c.b16 %v845, %v841
    %v1242 = vpack.c.b16 %v846, %v842
    %v1243 = vpack.c.b16 %v851, %v847
    %v1244 = vpack.c.b16 %v852, %v848
    %v1245 = vpack.c.b16 %v853, %v849
    %v1246 = vpack.c.b16 %v854, %v850
    %v1247 = vpack.c.b16 %v859, %v855
    %v1248 = vpack.c.b16 %v860, %v856
    %v1249 = vpack.c.b16 %v861, %v857
    %v1250 = vpack.c.b16 %v862, %v858
    %v1251 = vpack.c.b16 %v867, %v863
    %v1252 = vpack.c.b16 %v868, %v864
    %v1253 = vpack.c.b16 %v869, %v865
    %v1254 = vpack.c.b16 %v870, %v866
    %v1255 = vpack.c.b16 %v875, %v871
    %v1256 = vpack.c.b16 %v876, %v872
    %v1257 = vpack.c.b16 %v877, %v873
    %v1258 = vpack.c.b16 %v878, %v874
    %v1259 = vpack.c.b16 %v883, %v879
    %v1260 = vpack.c.b16 %v884, %v880
    %v1261 = vpack.c.b16 %v885, %v881
    %v1262 = vpack.c.b16 %v886, %v882
    %v1263 = vpack.c.b16 %v891, %v887
    %v1264 = vpack.c.b16 %v892, %v888
    %v1265 = vpack.c.b16 %v893, %v889
    %v1266 = vpack.c.b16 %v894, %v890
    %v1267 = vpack.c.b16 %v899, %v895
    %v1268 = vpack.c.b16 %v900, %v896
    %v1269 = vpack.c.b16 %v901, %v897
    %v1270 = vpack.c.b16 %v902, %v898
    %v1271 = vpack.c.b16 %v907, %v903
    %v1272 = vpack.c.b16 %v908, %v904
    %v1273 = vpack.c.b16 %v909, %v905
    %v1274 = vpack.c.b16 %v910, %v906
    %v1275 = vpack.c.b16 %v915, %v911
    %v1276 = vpack.c.b16 %v916, %v912
    %v1277 = vpack.c.b16 %v917, %v913
    %v1278 = vpack.c.b16 %v918, %v914
    %v1279 = vpack.c.b16 %v923, %v919
    %v1280 = vpack.c.b16 %v924, %v920
    %v1281 = vpack.c.b16 %v925, %v921
    %v1282 = vpack.c.b16 %v926, %v922
    %v1283 = vpack.c.b16 %v931, %v927
    %v1284 = vpack.c.b16 %v932, %v928
    %v1285 = vpack.c.b16 %v933, %v929
    %v1286 = vpack.c.b16 %v934, %v930
    %v1287 = vpack.c.b16 %v939, %v935
    %v1288 = vpack.c.b16 %v940, %v936
    %v1289 = vpack.c.b16 %v941, %v937
    %v1290 = vpack.c.b16 %v942, %v938
    %v1291 = vpack.c.b16 %v947, %v943
    %v1292 = vpack.c.b16 %v948, %v944
    %v1293 = vpack.c.b16 %v949, %v945
    %v1294 = vpack.c.b16 %v950, %v946
    %v1295 = vpack.c.b16 %v955, %v951
    %v1296 = vpack.c.b16 %v956, %v952
    %v1297 = vpack.c.b16 %v957, %v953
    %v1298 = vpack.c.b16 %v958, %v954
    %v1299 = vpack.c.b16 %v963, %v959
    %v1300 = vpack.c.b16 %v964, %v960
    %v1301 = vpack.c.b16 %v965, %v961
    %v1302 = vpack.c.b16 %v966, %v962
    %v1303 = vpack.c.b16 %v971, %v967
    %v1304 = vpack.c.b16 %v972, %v968
    %v1305 = vpack.c.b16 %v973, %v969
    %v1306 = vpack.c.b16 %v974, %v970
    %v1307 = vpack.c.b16 %v979, %v975
    %v1308 = vpack.c.b16 %v980, %v976
    %v1309 = vpack.c.b16 %v981, %v977
    %v1310 = vpack.c.b16 %v982, %v978
    %v1311 = vpack.c.b16 %v987, %v983
    %v1312 = vpack.c.b16 %v988, %v984
    %v1313 = vpack.c.b16 %v989, %v985
    %v1314 = vpack.c.b16 %v990, %v986
    %v1315 = vpack.c.b16 %v995, %v991
    %v1316 = vpack.c.b16 %v996, %v992
    %v1317 = vpack.c.b16 %v997, %v993
    %v1318 = vpack.c.b16 %v998, %v994
    %v1319 = vpack.c.b16 %v1003, %v999
    %v1320 = vpack.c.b16 %v1004, %v1000
    %v1321 = vpack.c.b16 %v1005, %v1001
    %v1322 = vpack.c.b16 %v1006, %v1002
    %v1323 = vpack.c.b16 %v1011, %v1007
    %v1324 = vpack.c.b16 %v1012, %v1008
    %v1325 = vpack.c.b16 %v1013, %v1009
    %v1326 = vpack.c.b16 %v1014, %v1010
    %v1327 = vpack.c.b16 %v1019, %v1015
    %v1328 = vpack.c.b16 %v1020, %v1016
    %v1329 = vpack.c.b16 %v1021, %v1017
    %v1330 = vpack.c.b16 %v1022, %v1018
    %v1331 = vpack.c.b16 %v1027, %v1023
    %v1332 = vpack.c.b16 %v1028, %v1024
    %v1333 = vpack.c.b16 %v1029, %v1025
    %v1334 = vpack.c.b16 %v1030, %v1026
    %v1335 = vpack.c.b16 %v1035, %v1031
    %v1336 = vpack.c.b16 %v1036, %v1032
    %v1337 = vpack.c.b16 %v1037, %v1033
    %v1338 = vpack.c.b16 %v1038, %v1034
    %v1339 = vpack.c.b16 %v1043, %v1039
    %v1340 = vpack.c.b16 %v1044, %v1040
    %v1341 = vpack.c.b16 %v1045, %v1041
    %v1342 = vpack.c.b16 %v1046, %v1042
    %v1343 = vpack.c.b16 %v1051, %v1047
    %v1344 = vpack.c.b16 %v1052, %v1048
    %v1345 = vpack.c.b16 %v1053, %v1049
    %v1346 = vpack.c.b16 %v1054, %v1050
    %v1347 = vpack.c.b16 %v1059, %v1055
    %v1348 = vpack.c.b16 %v1060, %v1056
    %v1349 = vpack.c.b16 %v1061, %v1057
    %v1350 = vpack.c.b16 %v1062, %v1058
    %v1351 = vpack.c.b16 %v1067, %v1063
    %v1352 = vpack.c.b16 %v1068, %v1064
    %v1353 = vpack.c.b16 %v1069, %v1065
    %v1354 = vpack.c.b16 %v1070, %v1066
    %v1355 = vpack.c.b16 %v1075, %v1071
    %v1356 = vpack.c.b16 %v1076, %v1072
    %v1357 = vpack.c.b16 %v1077, %v1073
    %v1358 = vpack.c.b16 %v1078, %v1074
    %v1359 = vpack.c.b16 %v1083, %v1079
    %v1360 = vpack.c.b16 %v1084, %v1080
    %v1361 = vpack.c.b16 %v1085, %v1081
    %v1362 = vpack.c.b16 %v1086, %v1082
    %v1363 = vpack.c.b16 %v1091, %v1087
    %v1364 = vpack.c.b16 %v1092, %v1088
    %v1365 = vpack.c.b16 %v1093, %v1089
    %v1366 = vpack.c.b16 %v1094, %v1090
    %v1367 = vpack.c.b16 %v1099, %v1095
    %v1368 = vpack.c.b16 %v1100, %v1096
    %v1369 = vpack.c.b16 %v1101, %v1097
    %v1370 = vpack.c.b16 %v1102, %v1098
    %v1371 = vpack.c.b16 %v1107, %v1103
    %v1372 = vpack.c.b16 %v1108, %v1104
    %v1373 = vpack.c.b16 %v1109, %v1105
    %v1374 = vpack.c.b16 %v1110, %v1106
    %v1375 = vpack.c.b16 %v1115, %v1111
    %v1376 = vpack.c.b16 %v1116, %v1112
    %v1377 = vpack.c.b16 %v1117, %v1113
    %v1378 = vpack.c.b16 %v1118, %v1114
    %v1379 = vpack.c.b16 %v1123, %v1119
    %v1380 = vpack.c.b16 %v1124, %v1120
    %v1381 = vpack.c.b16 %v1125, %v1121
    %v1382 = vpack.c.b16 %v1126, %v1122
    %1639 = vmatprep.subr.bf16.mxu0 %v1156
    %1640 = vmatpush1.bf16.msra.mxu0 %v1155
    %1641 = vmatprep.subr.bf16.mxu0 %v1152
    %1642 = vmatpush1.bf16.msra.mxu0 %v1151
    %1643 = vmatprep.subr.bf16.mxu0 %v1148
    %1644 = vmatpush1.bf16.msra.mxu0 %v1147
    %1645 = vmatprep.subr.bf16.mxu0 %v1144
    %1646 = vmatpush1.bf16.msra.mxu0 %v1143
    %1647 = vmatprep.subr.bf16.mxu0 %v1140
    %1648 = vmatpush1.bf16.msra.mxu0 %v1139
    %1649 = vmatprep.subr.bf16.mxu0 %v1136
    %1650 = vmatpush1.bf16.msra.mxu0 %v1135
    %1651 = vmatprep.subr.bf16.mxu0 %v1132
    %1652 = vmatpush1.bf16.msra.mxu0 %v1131
    %1653 = vmatprep.subr.bf16.mxu0 %v1128
    %1654 = vmatpush1.bf16.msra.mxu0 %v1127
    %1655 = vmatprep.subr.bf16.mxu0 %v1188
    %1656 = vmatpush2.bf16.msra.mxu0 %v1187
    %1657 = vmatprep.subr.bf16.mxu0 %v1184
    %1658 = vmatpush2.bf16.msra.mxu0 %v1183
    %1659 = vmatprep.subr.bf16.mxu0 %v1180
    %1660 = vmatpush2.bf16.msra.mxu0 %v1179
    %1661 = vmatprep.subr.bf16.mxu0 %v1176
    %1662 = vmatpush2.bf16.msra.mxu0 %v1175
    %1663 = vmatprep.subr.bf16.mxu0 %v1172
    %1664 = vmatpush2.bf16.msra.mxu0 %v1171
    %1665 = vmatprep.subr.bf16.mxu0 %v1168
    %1666 = vmatpush2.bf16.msra.mxu0 %v1167
    %1667 = vmatprep.subr.bf16.mxu0 %v1164
    %1668 = vmatpush2.bf16.msra.mxu0 %v1163
    %1669 = vmatprep.subr.bf16.mxu0 %v1160
    %1670 = vmatpush2.bf16.msra.mxu0 %v1159
    %1671 = vmatprep.mubr.bf16.mxu0 %v96
    %1672 = vmatmul.mubr.bf16.gmra.mxu0 %v95
    %v1673 = vpop.f32.mrf.mxu0
    %v1674 = vadd.f32 0.0, %v1673
    %v1675 = vpop.f32.mrf.mxu0
    %v1676 = vadd.f32 0.0, %v1675
    %v1677 = vpop.f32.mrf.mxu0
    %v1678 = vpop.f32.mrf.mxu0
    %1679 = vdwg.mxu0
    %1680 = vmatprep.subr.bf16.mxu0 %v1220
    %1681 = vmatpush1.bf16.msra.mxu0 %v1219
    %1682 = vmatprep.subr.bf16.mxu0 %v1216
    %1683 = vmatpush1.bf16.msra.mxu0 %v1215
    %1684 = vmatprep.subr.bf16.mxu0 %v1212
    %1685 = vmatpush1.bf16.msra.mxu0 %v1211
    %1686 = vmatprep.subr.bf16.mxu0 %v1208
    %1687 = vmatpush1.bf16.msra.mxu0 %v1207
    %1688 = vmatprep.subr.bf16.mxu0 %v1204
    %1689 = vmatpush1.bf16.msra.mxu0 %v1203
    %1690 = vmatprep.subr.bf16.mxu0 %v1200
    %1691 = vmatpush1.bf16.msra.mxu0 %v1199
    %1692 = vmatprep.subr.bf16.mxu0 %v1196
    %1693 = vmatpush1.bf16.msra.mxu0 %v1195
    %1694 = vmatprep.subr.bf16.mxu0 %v1192
    %1695 = vmatpush1.bf16.msra.mxu0 %v1191
    %1696 = vmatprep.subr.bf16.mxu0 %v1252
    %1697 = vmatpush2.bf16.msra.mxu0 %v1251
    %1698 = vmatprep.subr.bf16.mxu0 %v1248
    %1699 = vmatpush2.bf16.msra.mxu0 %v1247
    %1700 = vmatprep.subr.bf16.mxu0 %v1244
    %1701 = vmatpush2.bf16.msra.mxu0 %v1243
    %1702 = vmatprep.subr.bf16.mxu0 %v1240
    %1703 = vmatpush2.bf16.msra.mxu0 %v1239
    %1704 = vmatprep.subr.bf16.mxu0 %v1236
    %1705 = vmatpush2.bf16.msra.mxu0 %v1235
    %1706 = vmatprep.subr.bf16.mxu0 %v1232
    %1707 = vmatpush2.bf16.msra.mxu0 %v1231
    %1708 = vmatprep.subr.bf16.mxu0 %v1228
    %1709 = vmatpush2.bf16.msra.mxu0 %v1227
    %1710 = vmatprep.subr.bf16.mxu0 %v1224
    %1711 = vmatpush2.bf16.msra.mxu0 %v1223
    %1712 = vmatprep.mubr.bf16.mxu0 %v98
    %1713 = vmatmul.mubr.bf16.gmra.mxu0 %v97
    %v1714 = vpop.f32.mrf.mxu0
    %v1715 = vadd.f32 %v1674, %v1714
    %v1716 = vpop.f32.mrf.mxu0
    %v1717 = vadd.f32 %v1676, %v1716
    %v1718 = vpop.f32.mrf.mxu0
    %v1719 = vpop.f32.mrf.mxu0
    %1720 = vdwg.mxu0
    %1721 = vmatprep.subr.bf16.mxu0 %v1284
    %1722 = vmatpush1.bf16.msra.mxu0 %v1283
    %1723 = vmatprep.subr.bf16.mxu0 %v1280
    %1724 = vmatpush1.bf16.msra.mxu0 %v1279
    %1725 = vmatprep.subr.bf16.mxu0 %v1276
    %1726 = vmatpush1.bf16.msra.mxu0 %v1275
    %1727 = vmatprep.subr.bf16.mxu0 %v1272
    %1728 = vmatpush1.bf16.msra.mxu0 %v1271
    %1729 = vmatprep.subr.bf16.mxu0 %v1268
    %1730 = vmatpush1.bf16.msra.mxu0 %v1267
    %1731 = vmatprep.subr.bf16.mxu0 %v1264
    %1732 = vmatpush1.bf16.msra.mxu0 %v1263
    %1733 = vmatprep.subr.bf16.mxu0 %v1260
    %1734 = vmatpush1.bf16.msra.mxu0 %v1259
    %1735 = vmatprep.subr.bf16.mxu0 %v1256
    %1736 = vmatpush1.bf16.msra.mxu0 %v1255
    %1737 = vmatprep.subr.bf16.mxu0 %v1316
    %1738 = vmatpush2.bf16.msra.mxu0 %v1315
    %1739 = vmatprep.subr.bf16.mxu0 %v1312
    %1740 = vmatpush2.bf16.msra.mxu0 %v1311
    %1741 = vmatprep.subr.bf16.mxu0 %v1308
    %1742 = vmatpush2.bf16.msra.mxu0 %v1307
    %1743 = vmatprep.subr.bf16.mxu0 %v1304
    %1744 = vmatpush2.bf16.msra.mxu0 %v1303
    %1745 = vmatprep.subr.bf16.mxu0 %v1300
    %1746 = vmatpush2.bf16.msra.mxu0 %v1299
    %1747 = vmatprep.subr.bf16.mxu0 %v1296
    %1748 = vmatpush2.bf16.msra.mxu0 %v1295
    %1749 = vmatprep.subr.bf16.mxu0 %v1292
    %1750 = vmatpush2.bf16.msra.mxu0 %v1291
    %1751 = vmatprep.subr.bf16.mxu0 %v1288
    %1752 = vmatpush2.bf16.msra.mxu0 %v1287
    %1753 = vmatprep.mubr.bf16.mxu0 %v100
    %1754 = vmatmul.mubr.bf16.gmra.mxu0 %v99
    %v1755 = vpop.f32.mrf.mxu0
    %v1756 = vadd.f32 %v1715, %v1755
    %v1757 = vpop.f32.mrf.mxu0
    %v1758 = vadd.f32 %v1717, %v1757
    %v1759 = vpop.f32.mrf.mxu0
    %v1760 = vpop.f32.mrf.mxu0
    %1761 = vdwg.mxu0
    %1762 = vmatprep.subr.bf16.mxu0 %v1348
    %1763 = vmatpush1.bf16.msra.mxu0 %v1347
    %1764 = vmatprep.subr.bf16.mxu0 %v1344
    %1765 = vmatpush1.bf16.msra.mxu0 %v1343
    %1766 = vmatprep.subr.bf16.mxu0 %v1340
    %1767 = vmatpush1.bf16.msra.mxu0 %v1339
    %1768 = vmatprep.subr.bf16.mxu0 %v1336
    %1769 = vmatpush1.bf16.msra.mxu0 %v1335
    %1770 = vmatprep.subr.bf16.mxu0 %v1332
    %1771 = vmatpush1.bf16.msra.mxu0 %v1331
    %1772 = vmatprep.subr.bf16.mxu0 %v1328
    %1773 = vmatpush1.bf16.msra.mxu0 %v1327
    %1774 = vmatprep.subr.bf16.mxu0 %v1324
    %1775 = vmatpush1.bf16.msra.mxu0 %v1323
    %1776 = vmatprep.subr.bf16.mxu0 %v1320
    %1777 = vmatpush1.bf16.msra.mxu0 %v1319
    %1778 = vmatprep.subr.bf16.mxu0 %v1380
    %1779 = vmatpush2.bf16.msra.mxu0 %v1379
    %1780 = vmatprep.subr.bf16.mxu0 %v1376
    %1781 = vmatpush2.bf16.msra.mxu0 %v1375
    %1782 = vmatprep.subr.bf16.mxu0 %v1372
    %1783 = vmatpush2.bf16.msra.mxu0 %v1371
    %1784 = vmatprep.subr.bf16.mxu0 %v1368
    %1785 = vmatpush2.bf16.msra.mxu0 %v1367
    %1786 = vmatprep.subr.bf16.mxu0 %v1364
    %1787 = vmatpush2.bf16.msra.mxu0 %v1363
    %1788 = vmatprep.subr.bf16.mxu0 %v1360
    %1789 = vmatpush2.bf16.msra.mxu0 %v1359
    %1790 = vmatprep.subr.bf16.mxu0 %v1356
    %1791 = vmatpush2.bf16.msra.mxu0 %v1355
    %1792 = vmatprep.subr.bf16.mxu0 %v1352
    %1793 = vmatpush2.bf16.msra.mxu0 %v1351
    %1794 = vmatprep.mubr.bf16.mxu0 %v102
    %1795 = vmatmul.mubr.bf16.gmra.mxu0 %v101
    %v1796 = vpop.f32.mrf.mxu0
    %v1797 = vadd.f32 %v1756, %v1796
    %v1798 = vpop.f32.mrf.mxu0
    %v1799 = vadd.f32 %v1758, %v1798
    %v1800 = vpop.f32.mrf.mxu0
    %v1801 = vpop.f32.mrf.mxu0
    %1802 = vdwg.mxu0
    %1803 = vmatprep.subr.bf16.mxu0 %v1158
    %1804 = vmatpush1.bf16.msra.mxu0 %v1157
    %1805 = vmatprep.subr.bf16.mxu0 %v1154
    %1806 = vmatpush1.bf16.msra.mxu0 %v1153
    %1807 = vmatprep.subr.bf16.mxu0 %v1150
    %1808 = vmatpush1.bf16.msra.mxu0 %v1149
    %1809 = vmatprep.subr.bf16.mxu0 %v1146
    %1810 = vmatpush1.bf16.msra.mxu0 %v1145
    %1811 = vmatprep.subr.bf16.mxu0 %v1142
    %1812 = vmatpush1.bf16.msra.mxu0 %v1141
    %1813 = vmatprep.subr.bf16.mxu0 %v1138
    %1814 = vmatpush1.bf16.msra.mxu0 %v1137
    %1815 = vmatprep.subr.bf16.mxu0 %v1134
    %1816 = vmatpush1.bf16.msra.mxu0 %v1133
    %1817 = vmatprep.subr.bf16.mxu0 %v1130
    %1818 = vmatpush1.bf16.msra.mxu0 %v1129
    %1819 = vmatprep.subr.bf16.mxu0 %v1190
    %1820 = vmatpush2.bf16.msra.mxu0 %v1189
    %1821 = vmatprep.subr.bf16.mxu0 %v1186
    %1822 = vmatpush2.bf16.msra.mxu0 %v1185
    %1823 = vmatprep.subr.bf16.mxu0 %v1182
    %1824 = vmatpush2.bf16.msra.mxu0 %v1181
    %1825 = vmatprep.subr.bf16.mxu0 %v1178
    %1826 = vmatpush2.bf16.msra.mxu0 %v1177
    %1827 = vmatprep.subr.bf16.mxu0 %v1174
    %1828 = vmatpush2.bf16.msra.mxu0 %v1173
    %1829 = vmatprep.subr.bf16.mxu0 %v1170
    %1830 = vmatpush2.bf16.msra.mxu0 %v1169
    %1831 = vmatprep.subr.bf16.mxu0 %v1166
    %1832 = vmatpush2.bf16.msra.mxu0 %v1165
    %1833 = vmatprep.subr.bf16.mxu0 %v1162
    %1834 = vmatpush2.bf16.msra.mxu0 %v1161
    %1835 = vmatprep.mubr.bf16.mxu0 %v96
    %1836 = vmatmul.mubr.bf16.gmra.mxu0 %v95
    %v1837 = vpop.f32.mrf.mxu0
    %v1838 = vadd.f32 0.0, %v1837
    %v1839 = vpop.f32.mrf.mxu0
    %v1840 = vadd.f32 0.0, %v1839
    %v1841 = vpop.f32.mrf.mxu0
    %v1842 = vpop.f32.mrf.mxu0
    %1843 = vdwg.mxu0
    %1844 = vmatprep.subr.bf16.mxu0 %v1222
    %1845 = vmatpush1.bf16.msra.mxu0 %v1221
    %1846 = vmatprep.subr.bf16.mxu0 %v1218
    %1847 = vmatpush1.bf16.msra.mxu0 %v1217
    %1848 = vmatprep.subr.bf16.mxu0 %v1214
    %1849 = vmatpush1.bf16.msra.mxu0 %v1213
    %1850 = vmatprep.subr.bf16.mxu0 %v1210
    %1851 = vmatpush1.bf16.msra.mxu0 %v1209
    %1852 = vmatprep.subr.bf16.mxu0 %v1206
    %1853 = vmatpush1.bf16.msra.mxu0 %v1205
    %1854 = vmatprep.subr.bf16.mxu0 %v1202
    %1855 = vmatpush1.bf16.msra.mxu0 %v1201
    %1856 = vmatprep.subr.bf16.mxu0 %v1198
    %1857 = vmatpush1.bf16.msra.mxu0 %v1197
    %1858 = vmatprep.subr.bf16.mxu0 %v1194
    %1859 = vmatpush1.bf16.msra.mxu0 %v1193
    %1860 = vmatprep.subr.bf16.mxu0 %v1254
    %1861 = vmatpush2.bf16.msra.mxu0 %v1253
    %1862 = vmatprep.subr.bf16.mxu0 %v1250
    %1863 = vmatpush2.bf16.msra.mxu0 %v1249
    %1864 = vmatprep.subr.bf16.mxu0 %v1246
    %1865 = vmatpush2.bf16.msra.mxu0 %v1245
    %1866 = vmatprep.subr.bf16.mxu0 %v1242
    %1867 = vmatpush2.bf16.msra.mxu0 %v1241
    %1868 = vmatprep.subr.bf16.mxu0 %v1238
    %1869 = vmatpush2.bf16.msra.mxu0 %v1237
    %1870 = vmatprep.subr.bf16.mxu0 %v1234
    %1871 = vmatpush2.bf16.msra.mxu0 %v1233
    %1872 = vmatprep.subr.bf16.mxu0 %v1230
    %1873 = vmatpush2.bf16.msra.mxu0 %v1229
    %1874 = vmatprep.subr.bf16.mxu0 %v1226
    %1875 = vmatpush2.bf16.msra.mxu0 %v1225
    %1876 = vmatprep.mubr.bf16.mxu0 %v98
    %1877 = vmatmul.mubr.bf16.gmra.mxu0 %v97
    %v1878 = vpop.f32.mrf.mxu0
    %v1879 = vadd.f32 %v1838, %v1878
    %v1880 = vpop.f32.mrf.mxu0
    %v1881 = vadd.f32 %v1840, %v1880
    %v1882 = vpop.f32.mrf.mxu0
    %v1883 = vpop.f32.mrf.mxu0
    %1884 = vdwg.mxu0
    %1885 = vmatprep.subr.bf16.mxu0 %v1286
    %1886 = vmatpush1.bf16.msra.mxu0 %v1285
    %1887 = vmatprep.subr.bf16.mxu0 %v1282
    %1888 = vmatpush1.bf16.msra.mxu0 %v1281
    %1889 = vmatprep.subr.bf16.mxu0 %v1278
    %1890 = vmatpush1.bf16.msra.mxu0 %v1277
    %1891 = vmatprep.subr.bf16.mxu0 %v1274
    %1892 = vmatpush1.bf16.msra.mxu0 %v1273
    %1893 = vmatprep.subr.bf16.mxu0 %v1270
    %1894 = vmatpush1.bf16.msra.mxu0 %v1269
    %1895 = vmatprep.subr.bf16.mxu0 %v1266
    %1896 = vmatpush1.bf16.msra.mxu0 %v1265
    %1897 = vmatprep.subr.bf16.mxu0 %v1262
    %1898 = vmatpush1.bf16.msra.mxu0 %v1261
    %1899 = vmatprep.subr.bf16.mxu0 %v1258
    %1900 = vmatpush1.bf16.msra.mxu0 %v1257
    %1901 = vmatprep.subr.bf16.mxu0 %v1318
    %1902 = vmatpush2.bf16.msra.mxu0 %v1317
    %1903 = vmatprep.subr.bf16.mxu0 %v1314
    %1904 = vmatpush2.bf16.msra.mxu0 %v1313
    %1905 = vmatprep.subr.bf16.mxu0 %v1310
    %1906 = vmatpush2.bf16.msra.mxu0 %v1309
    %1907 = vmatprep.subr.bf16.mxu0 %v1306
    %1908 = vmatpush2.bf16.msra.mxu0 %v1305
    %1909 = vmatprep.subr.bf16.mxu0 %v1302
    %1910 = vmatpush2.bf16.msra.mxu0 %v1301
    %1911 = vmatprep.subr.bf16.mxu0 %v1298
    %1912 = vmatpush2.bf16.msra.mxu0 %v1297
    %1913 = vmatprep.subr.bf16.mxu0 %v1294
    %1914 = vmatpush2.bf16.msra.mxu0 %v1293
    %1915 = vmatprep.subr.bf16.mxu0 %v1290
    %1916 = vmatpush2.bf16.msra.mxu0 %v1289
    %1917 = vmatprep.mubr.bf16.mxu0 %v100
    %1918 = vmatmul.mubr.bf16.gmra.mxu0 %v99
    %v1919 = vpop.f32.mrf.mxu0
    %v1920 = vadd.f32 %v1879, %v1919
    %v1921 = vpop.f32.mrf.mxu0
    %v1922 = vadd.f32 %v1881, %v1921
    %v1923 = vpop.f32.mrf.mxu0
    %v1924 = vpop.f32.mrf.mxu0
    %1925 = vdwg.mxu0
    %1926 = vmatprep.subr.bf16.mxu0 %v1350
    %1927 = vmatpush1.bf16.msra.mxu0 %v1349
    %1928 = vmatprep.subr.bf16.mxu0 %v1346
    %1929 = vmatpush1.bf16.msra.mxu0 %v1345
    %1930 = vmatprep.subr.bf16.mxu0 %v1342
    %1931 = vmatpush1.bf16.msra.mxu0 %v1341
    %1932 = vmatprep.subr.bf16.mxu0 %v1338
    %1933 = vmatpush1.bf16.msra.mxu0 %v1337
    %1934 = vmatprep.subr.bf16.mxu0 %v1334
    %1935 = vmatpush1.bf16.msra.mxu0 %v1333
    %1936 = vmatprep.subr.bf16.mxu0 %v1330
    %1937 = vmatpush1.bf16.msra.mxu0 %v1329
    %1938 = vmatprep.subr.bf16.mxu0 %v1326
    %1939 = vmatpush1.bf16.msra.mxu0 %v1325
    %1940 = vmatprep.subr.bf16.mxu0 %v1322
    %1941 = vmatpush1.bf16.msra.mxu0 %v1321
    %1942 = vmatprep.subr.bf16.mxu0 %v1382
    %1943 = vmatpush2.bf16.msra.mxu0 %v1381
    %1944 = vmatprep.subr.bf16.mxu0 %v1378
    %1945 = vmatpush2.bf16.msra.mxu0 %v1377
    %1946 = vmatprep.subr.bf16.mxu0 %v1374
    %1947 = vmatpush2.bf16.msra.mxu0 %v1373
    %1948 = vmatprep.subr.bf16.mxu0 %v1370
    %1949 = vmatpush2.bf16.msra.mxu0 %v1369
    %1950 = vmatprep.subr.bf16.mxu0 %v1366
    %1951 = vmatpush2.bf16.msra.mxu0 %v1365
    %1952 = vmatprep.subr.bf16.mxu0 %v1362
    %1953 = vmatpush2.bf16.msra.mxu0 %v1361
    %1954 = vmatprep.subr.bf16.mxu0 %v1358
    %1955 = vmatpush2.bf16.msra.mxu0 %v1357
    %1956 = vmatprep.subr.bf16.mxu0 %v1354
    %1957 = vmatpush2.bf16.msra.mxu0 %v1353
    %1958 = vmatprep.mubr.bf16.mxu0 %v102
    %1959 = vmatmul.mubr.bf16.gmra.mxu0 %v101
    %v1960 = vpop.f32.mrf.mxu0
    %v1961 = vadd.f32 %v1920, %v1960
    %v1962 = vpop.f32.mrf.mxu0
    %v1963 = vadd.f32 %v1922, %v1962
    %v1964 = vpop.f32.mrf.mxu0
    %v1965 = vpop.f32.mrf.mxu0
    %1966 = vdwg.mxu0
    %v1967 = vadd.f32 %v83, %v1797
    %v1968 = vadd.f32 %v84, %v1799
    %v1969 = vadd.f32 %v85, %v1961
    %v1970 = vadd.f32 %v86, %v1963
    %1971 = vst [vmem:[#allocation2] sm:$0xff] %v1967
    %1972 = vst [vmem:[#allocation2 + $0x8] sm:$0xff] %v1968
    %1973 = vst [vmem:[#allocation2 + $0x10] sm:$0xff] %v1969
    %1974 = vst [vmem:[#allocation2 + $0x18] sm:$0xff] %v1970
    // Predicated region
    $region54: #{fc_discriminator_forward.1} parent=1 // pred_check
      %p1975 = pneg %p75
    $region55: #{fc_discriminator_forward.1} parent=1 // pred_check_branch
      %1977 = sbr.rel (%p1975) target = $region57
    $region56: #{fc_discriminator_forward.1} parent=1 // pred_region
      %v1978 = vld [vmem:[#allocation2] sm:$0xff]
      %v1979 = vld [vmem:[#allocation2 + $0x8] sm:$0xff]
      %v1980 = vld [vmem:[#allocation2 + $0x10] sm:$0xff]
      %v1981 = vld [vmem:[#allocation2 + $0x18] sm:$0xff]
      %v1982 = vld [vmem:[%s2] sm:$0xf]
      %v1984 = vlaneseq
      %v1985 = vshrl.u32 %v1984, 7
      %v1986 = vsub.s32 0, %v1985
      %v1987 = vrot.slane %v1982, %v1986
      %v1988 = vlaneseq
      %v1989 = vshrl.u32 %v1988, 7
      %v1990 = vsub.s32 1, %v1989
      %v1991 = vrot.slane %v1982, %v1990
      %v1992 = vlaneseq
      %v1993 = vshrl.u32 %v1992, 7
      %v1994 = vsub.s32 2, %v1993
      %v1995 = vrot.slane %v1982, %v1994
      %v1996 = vlaneseq
      %v1997 = vshrl.u32 %v1996, 7
      %v1998 = vsub.s32 3, %v1997
      %v1999 = vrot.slane %v1982, %v1998
      %v2004 = vadd.f32 %v1978, %v1987
      %v2005 = vadd.f32 %v1979, %v1991
      %v2006 = vadd.f32 %v1980, %v1995
      %v2007 = vadd.f32 %v1981, %v1999
      %vm2008 = vcmp.ge.f32.partialorder %v2004, 0.0
      %vm2009 = vcmp.ge.f32.partialorder %v2005, 0.0
      %vm2010 = vcmp.ge.f32.partialorder %v2006, 0.0
      %vm2011 = vcmp.ge.f32.partialorder %v2007, 0.0
      %v2012 = vmul.f32 %v2004, 0.2
      %v2013 = vmul.f32 %v2005, 0.2
      %v2014 = vmul.f32 %v2006, 0.2
      %v2015 = vmul.f32 %v2007, 0.2
      %v2016 = vsel %vm2008, %v2004, %v2012
      %v2017 = vsel %vm2009, %v2005, %v2013
      %v2018 = vsel %vm2010, %v2006, %v2014
      %v2019 = vsel %vm2011, %v2007, %v2015
      %v2020 = vpack.c.bf16 %v2016, %v2016
      %v2021 = vpack.c.bf16 %v2017, %v2017
      %v2022 = vpack.c.bf16 %v2018, %v2018
      %v2023 = vpack.c.bf16 %v2019, %v2019
      %v2024 = vld [vmem:[#allocation6] sm:$0xff]
      %v2025 = vld [vmem:[#allocation6 + $0x8] sm:$0xff]
      %v2026 = vld [vmem:[#allocation6 + $0x10] sm:$0xff]
      %v2027 = vld [vmem:[#allocation6 + $0x18] sm:$0xff]
      %v2028 = vld [vmem:[#allocation6 + $0x20] sm:$0xff]
      %v2029 = vld [vmem:[#allocation6 + $0x28] sm:$0xff]
      %v2030 = vld [vmem:[#allocation6 + $0x30] sm:$0xff]
      %v2031 = vld [vmem:[#allocation6 + $0x38] sm:$0xff]
      %v2032 = vld [vmem:[#allocation6 + $0x40] sm:$0xff]
      %v2033 = vld [vmem:[#allocation6 + $0x48] sm:$0xff]
      %v2034 = vld [vmem:[#allocation6 + $0x50] sm:$0xff]
      %v2035 = vld [vmem:[#allocation6 + $0x58] sm:$0xff]
      %v2036 = vld [vmem:[#allocation6 + $0x60] sm:$0xff]
      %v2037 = vld [vmem:[#allocation6 + $0x68] sm:$0xff]
      %v2038 = vld [vmem:[#allocation6 + $0x70] sm:$0xff]
      %v2039 = vld [vmem:[#allocation6 + $0x78] sm:$0xff]
      %v2040 = vld [vmem:[#allocation6 + $0x80] sm:$0xff]
      %v2041 = vld [vmem:[#allocation6 + $0x88] sm:$0xff]
      %v2042 = vld [vmem:[#allocation6 + $0x90] sm:$0xff]
      %v2043 = vld [vmem:[#allocation6 + $0x98] sm:$0xff]
      %v2044 = vld [vmem:[#allocation6 + $0xa0] sm:$0xff]
      %v2045 = vld [vmem:[#allocation6 + $0xa8] sm:$0xff]
      %v2046 = vld [vmem:[#allocation6 + $0xb0] sm:$0xff]
      %v2047 = vld [vmem:[#allocation6 + $0xb8] sm:$0xff]
      %v2048 = vld [vmem:[#allocation6 + $0xc0] sm:$0xff]
      %v2049 = vld [vmem:[#allocation6 + $0xc8] sm:$0xff]
      %v2050 = vld [vmem:[#allocation6 + $0xd0] sm:$0xff]
      %v2051 = vld [vmem:[#allocation6 + $0xd8] sm:$0xff]
      %v2052 = vld [vmem:[#allocation6 + $0xe0] sm:$0xff]
      %v2053 = vld [vmem:[#allocation6 + $0xe8] sm:$0xff]
      %v2054 = vld [vmem:[#allocation6 + $0xf0] sm:$0xff]
      %v2055 = vld [vmem:[#allocation6 + $0xf8] sm:$0xff]
      %v2056 = vld [vmem:[#allocation6 + $0x100] sm:$0xff]
      %v2057 = vld [vmem:[#allocation6 + $0x108] sm:$0xff]
      %v2058 = vld [vmem:[#allocation6 + $0x110] sm:$0xff]
      %v2059 = vld [vmem:[#allocation6 + $0x118] sm:$0xff]
      %v2060 = vld [vmem:[#allocation6 + $0x120] sm:$0xff]
      %v2061 = vld [vmem:[#allocation6 + $0x128] sm:$0xff]
      %v2062 = vld [vmem:[#allocation6 + $0x130] sm:$0xff]
      %v2063 = vld [vmem:[#allocation6 + $0x138] sm:$0xff]
      %v2064 = vld [vmem:[#allocation6 + $0x140] sm:$0xff]
      %v2065 = vld [vmem:[#allocation6 + $0x148] sm:$0xff]
      %v2066 = vld [vmem:[#allocation6 + $0x150] sm:$0xff]
      %v2067 = vld [vmem:[#allocation6 + $0x158] sm:$0xff]
      %v2068 = vld [vmem:[#allocation6 + $0x160] sm:$0xff]
      %v2069 = vld [vmem:[#allocation6 + $0x168] sm:$0xff]
      %v2070 = vld [vmem:[#allocation6 + $0x170] sm:$0xff]
      %v2071 = vld [vmem:[#allocation6 + $0x178] sm:$0xff]
      %v2072 = vld [vmem:[#allocation6 + $0x180] sm:$0xff]
      %v2073 = vld [vmem:[#allocation6 + $0x188] sm:$0xff]
      %v2074 = vld [vmem:[#allocation6 + $0x190] sm:$0xff]
      %v2075 = vld [vmem:[#allocation6 + $0x198] sm:$0xff]
      %v2076 = vld [vmem:[#allocation6 + $0x1a0] sm:$0xff]
      %v2077 = vld [vmem:[#allocation6 + $0x1a8] sm:$0xff]
      %v2078 = vld [vmem:[#allocation6 + $0x1b0] sm:$0xff]
      %v2079 = vld [vmem:[#allocation6 + $0x1b8] sm:$0xff]
      %v2080 = vld [vmem:[#allocation6 + $0x1c0] sm:$0xff]
      %v2081 = vld [vmem:[#allocation6 + $0x1c8] sm:$0xff]
      %v2082 = vld [vmem:[#allocation6 + $0x1d0] sm:$0xff]
      %v2083 = vld [vmem:[#allocation6 + $0x1d8] sm:$0xff]
      %v2084 = vld [vmem:[#allocation6 + $0x1e0] sm:$0xff]
      %v2085 = vld [vmem:[#allocation6 + $0x1e8] sm:$0xff]
      %v2086 = vld [vmem:[#allocation6 + $0x1f0] sm:$0xff]
      %v2087 = vld [vmem:[#allocation6 + $0x1f8] sm:$0xff]
      %v2088 = vld [vmem:[%s4] sm:$0x3]
      %v2090 = vlaneseq
      %v2091 = vshrl.u32 %v2090, 7
      %v2092 = vsub.s32 0, %v2091
      %v2093 = vrot.slane %v2088, %v2092
      %v2094 = vlaneseq
      %v2095 = vshrl.u32 %v2094, 7
      %v2096 = vsub.s32 1, %v2095
      %v2097 = vrot.slane %v2088, %v2096
      %v2164 = vunpack.c.l.b16 %v2024
      %v2165 = vunpack.c.h.b16 %v2024
      %v2166 = vunpack.c.l.b16 %v2025
      %v2167 = vunpack.c.h.b16 %v2025
      %v2168 = vunpack.c.l.b16 %v2026
      %v2169 = vunpack.c.h.b16 %v2026
      %v2170 = vunpack.c.l.b16 %v2027
      %v2171 = vunpack.c.h.b16 %v2027
      %v2172 = vunpack.c.l.b16 %v2028
      %v2173 = vunpack.c.h.b16 %v2028
      %v2174 = vunpack.c.l.b16 %v2029
      %v2175 = vunpack.c.h.b16 %v2029
      %v2176 = vunpack.c.l.b16 %v2030
      %v2177 = vunpack.c.h.b16 %v2030
      %v2178 = vunpack.c.l.b16 %v2031
      %v2179 = vunpack.c.h.b16 %v2031
      %v2180 = vunpack.c.l.b16 %v2032
      %v2181 = vunpack.c.h.b16 %v2032
      %v2182 = vunpack.c.l.b16 %v2033
      %v2183 = vunpack.c.h.b16 %v2033
      %v2184 = vunpack.c.l.b16 %v2034
      %v2185 = vunpack.c.h.b16 %v2034
      %v2186 = vunpack.c.l.b16 %v2035
      %v2187 = vunpack.c.h.b16 %v2035
      %v2188 = vunpack.c.l.b16 %v2036
      %v2189 = vunpack.c.h.b16 %v2036
      %v2190 = vunpack.c.l.b16 %v2037
      %v2191 = vunpack.c.h.b16 %v2037
      %v2192 = vunpack.c.l.b16 %v2038
      %v2193 = vunpack.c.h.b16 %v2038
      %v2194 = vunpack.c.l.b16 %v2039
      %v2195 = vunpack.c.h.b16 %v2039
      %v2196 = vunpack.c.l.b16 %v2040
      %v2197 = vunpack.c.h.b16 %v2040
      %v2198 = vunpack.c.l.b16 %v2041
      %v2199 = vunpack.c.h.b16 %v2041
      %v2200 = vunpack.c.l.b16 %v2042
      %v2201 = vunpack.c.h.b16 %v2042
      %v2202 = vunpack.c.l.b16 %v2043
      %v2203 = vunpack.c.h.b16 %v2043
      %v2204 = vunpack.c.l.b16 %v2044
      %v2205 = vunpack.c.h.b16 %v2044
      %v2206 = vunpack.c.l.b16 %v2045
      %v2207 = vunpack.c.h.b16 %v2045
      %v2208 = vunpack.c.l.b16 %v2046
      %v2209 = vunpack.c.h.b16 %v2046
      %v2210 = vunpack.c.l.b16 %v2047
      %v2211 = vunpack.c.h.b16 %v2047
      %v2212 = vunpack.c.l.b16 %v2048
      %v2213 = vunpack.c.h.b16 %v2048
      %v2214 = vunpack.c.l.b16 %v2049
      %v2215 = vunpack.c.h.b16 %v2049
      %v2216 = vunpack.c.l.b16 %v2050
      %v2217 = vunpack.c.h.b16 %v2050
      %v2218 = vunpack.c.l.b16 %v2051
      %v2219 = vunpack.c.h.b16 %v2051
      %v2220 = vunpack.c.l.b16 %v2052
      %v2221 = vunpack.c.h.b16 %v2052
      %v2222 = vunpack.c.l.b16 %v2053
      %v2223 = vunpack.c.h.b16 %v2053
      %v2224 = vunpack.c.l.b16 %v2054
      %v2225 = vunpack.c.h.b16 %v2054
      %v2226 = vunpack.c.l.b16 %v2055
      %v2227 = vunpack.c.h.b16 %v2055
      %v2228 = vunpack.c.l.b16 %v2056
      %v2229 = vunpack.c.h.b16 %v2056
      %v2230 = vunpack.c.l.b16 %v2057
      %v2231 = vunpack.c.h.b16 %v2057
      %v2232 = vunpack.c.l.b16 %v2058
      %v2233 = vunpack.c.h.b16 %v2058
      %v2234 = vunpack.c.l.b16 %v2059
      %v2235 = vunpack.c.h.b16 %v2059
      %v2236 = vunpack.c.l.b16 %v2060
      %v2237 = vunpack.c.h.b16 %v2060
      %v2238 = vunpack.c.l.b16 %v2061
      %v2239 = vunpack.c.h.b16 %v2061
      %v2240 = vunpack.c.l.b16 %v2062
      %v2241 = vunpack.c.h.b16 %v2062
      %v2242 = vunpack.c.l.b16 %v2063
      %v2243 = vunpack.c.h.b16 %v2063
      %v2244 = vunpack.c.l.b16 %v2064
      %v2245 = vunpack.c.h.b16 %v2064
      %v2246 = vunpack.c.l.b16 %v2065
      %v2247 = vunpack.c.h.b16 %v2065
      %v2248 = vunpack.c.l.b16 %v2066
      %v2249 = vunpack.c.h.b16 %v2066
      %v2250 = vunpack.c.l.b16 %v2067
      %v2251 = vunpack.c.h.b16 %v2067
      %v2252 = vunpack.c.l.b16 %v2068
      %v2253 = vunpack.c.h.b16 %v2068
      %v2254 = vunpack.c.l.b16 %v2069
      %v2255 = vunpack.c.h.b16 %v2069
      %v2256 = vunpack.c.l.b16 %v2070
      %v2257 = vunpack.c.h.b16 %v2070
      %v2258 = vunpack.c.l.b16 %v2071
      %v2259 = vunpack.c.h.b16 %v2071
      %v2260 = vunpack.c.l.b16 %v2072
      %v2261 = vunpack.c.h.b16 %v2072
      %v2262 = vunpack.c.l.b16 %v2073
      %v2263 = vunpack.c.h.b16 %v2073
      %v2264 = vunpack.c.l.b16 %v2074
      %v2265 = vunpack.c.h.b16 %v2074
      %v2266 = vunpack.c.l.b16 %v2075
      %v2267 = vunpack.c.h.b16 %v2075
      %v2268 = vunpack.c.l.b16 %v2076
      %v2269 = vunpack.c.h.b16 %v2076
      %v2270 = vunpack.c.l.b16 %v2077
      %v2271 = vunpack.c.h.b16 %v2077
      %v2272 = vunpack.c.l.b16 %v2078
      %v2273 = vunpack.c.h.b16 %v2078
      %v2274 = vunpack.c.l.b16 %v2079
      %v2275 = vunpack.c.h.b16 %v2079
      %v2276 = vunpack.c.l.b16 %v2080
      %v2277 = vunpack.c.h.b16 %v2080
      %v2278 = vunpack.c.l.b16 %v2081
      %v2279 = vunpack.c.h.b16 %v2081
      %v2280 = vunpack.c.l.b16 %v2082
      %v2281 = vunpack.c.h.b16 %v2082
      %v2282 = vunpack.c.l.b16 %v2083
      %v2283 = vunpack.c.h.b16 %v2083
      %v2284 = vunpack.c.l.b16 %v2084
      %v2285 = vunpack.c.h.b16 %v2084
      %v2286 = vunpack.c.l.b16 %v2085
      %v2287 = vunpack.c.h.b16 %v2085
      %v2288 = vunpack.c.l.b16 %v2086
      %v2289 = vunpack.c.h.b16 %v2086
      %v2290 = vunpack.c.l.b16 %v2087
      %v2291 = vunpack.c.h.b16 %v2087
      %v2292 = vpack.c.b16 %v2166, %v2164
      %v2293 = vpack.c.b16 %v2167, %v2165
      %v2294 = vpack.c.b16 %v2170, %v2168
      %v2295 = vpack.c.b16 %v2171, %v2169
      %v2296 = vpack.c.b16 %v2174, %v2172
      %v2297 = vpack.c.b16 %v2175, %v2173
      %v2298 = vpack.c.b16 %v2178, %v2176
      %v2299 = vpack.c.b16 %v2179, %v2177
      %v2300 = vpack.c.b16 %v2182, %v2180
      %v2301 = vpack.c.b16 %v2183, %v2181
      %v2302 = vpack.c.b16 %v2186, %v2184
      %v2303 = vpack.c.b16 %v2187, %v2185
      %v2304 = vpack.c.b16 %v2190, %v2188
      %v2305 = vpack.c.b16 %v2191, %v2189
      %v2306 = vpack.c.b16 %v2194, %v2192
      %v2307 = vpack.c.b16 %v2195, %v2193
      %v2308 = vpack.c.b16 %v2198, %v2196
      %v2309 = vpack.c.b16 %v2199, %v2197
      %v2310 = vpack.c.b16 %v2202, %v2200
      %v2311 = vpack.c.b16 %v2203, %v2201
      %v2312 = vpack.c.b16 %v2206, %v2204
      %v2313 = vpack.c.b16 %v2207, %v2205
      %v2314 = vpack.c.b16 %v2210, %v2208
      %v2315 = vpack.c.b16 %v2211, %v2209
      %v2316 = vpack.c.b16 %v2214, %v2212
      %v2317 = vpack.c.b16 %v2215, %v2213
      %v2318 = vpack.c.b16 %v2218, %v2216
      %v2319 = vpack.c.b16 %v2219, %v2217
      %v2320 = vpack.c.b16 %v2222, %v2220
      %v2321 = vpack.c.b16 %v2223, %v2221
      %v2322 = vpack.c.b16 %v2226, %v2224
      %v2323 = vpack.c.b16 %v2227, %v2225
      %v2324 = vpack.c.b16 %v2230, %v2228
      %v2325 = vpack.c.b16 %v2231, %v2229
      %v2326 = vpack.c.b16 %v2234, %v2232
      %v2327 = vpack.c.b16 %v2235, %v2233
      %v2328 = vpack.c.b16 %v2238, %v2236
      %v2329 = vpack.c.b16 %v2239, %v2237
      %v2330 = vpack.c.b16 %v2242, %v2240
      %v2331 = vpack.c.b16 %v2243, %v2241
      %v2332 = vpack.c.b16 %v2246, %v2244
      %v2333 = vpack.c.b16 %v2247, %v2245
      %v2334 = vpack.c.b16 %v2250, %v2248
      %v2335 = vpack.c.b16 %v2251, %v2249
      %v2336 = vpack.c.b16 %v2254, %v2252
      %v2337 = vpack.c.b16 %v2255, %v2253
      %v2338 = vpack.c.b16 %v2258, %v2256
      %v2339 = vpack.c.b16 %v2259, %v2257
      %v2340 = vpack.c.b16 %v2262, %v2260
      %v2341 = vpack.c.b16 %v2263, %v2261
      %v2342 = vpack.c.b16 %v2266, %v2264
      %v2343 = vpack.c.b16 %v2267, %v2265
      %v2344 = vpack.c.b16 %v2270, %v2268
      %v2345 = vpack.c.b16 %v2271, %v2269
      %v2346 = vpack.c.b16 %v2274, %v2272
      %v2347 = vpack.c.b16 %v2275, %v2273
      %v2348 = vpack.c.b16 %v2278, %v2276
      %v2349 = vpack.c.b16 %v2279, %v2277
      %v2350 = vpack.c.b16 %v2282, %v2280
      %v2351 = vpack.c.b16 %v2283, %v2281
      %v2352 = vpack.c.b16 %v2286, %v2284
      %v2353 = vpack.c.b16 %v2287, %v2285
      %v2354 = vpack.c.b16 %v2290, %v2288
      %v2355 = vpack.c.b16 %v2291, %v2289
      %2420 = vmatprep.subr.bf16.mxu0 %v2307
      %2421 = vmatpush1.bf16.msra.mxu0 %v2306
      %2422 = vmatprep.subr.bf16.mxu0 %v2305
      %2423 = vmatpush1.bf16.msra.mxu0 %v2304
      %2424 = vmatprep.subr.bf16.mxu0 %v2303
      %2425 = vmatpush1.bf16.msra.mxu0 %v2302
      %2426 = vmatprep.subr.bf16.mxu0 %v2301
      %2427 = vmatpush1.bf16.msra.mxu0 %v2300
      %2428 = vmatprep.subr.bf16.mxu0 %v2299
      %2429 = vmatpush1.bf16.msra.mxu0 %v2298
      %2430 = vmatprep.subr.bf16.mxu0 %v2297
      %2431 = vmatpush1.bf16.msra.mxu0 %v2296
      %2432 = vmatprep.subr.bf16.mxu0 %v2295
      %2433 = vmatpush1.bf16.msra.mxu0 %v2294
      %2434 = vmatprep.subr.bf16.mxu0 %v2293
      %2435 = vmatpush1.bf16.msra.mxu0 %v2292
      %2436 = vmatprep.subr.bf16.mxu0 %v2323
      %2437 = vmatpush2.bf16.msra.mxu0 %v2322
      %2438 = vmatprep.subr.bf16.mxu0 %v2321
      %2439 = vmatpush2.bf16.msra.mxu0 %v2320
      %2440 = vmatprep.subr.bf16.mxu0 %v2319
      %2441 = vmatpush2.bf16.msra.mxu0 %v2318
      %2442 = vmatprep.subr.bf16.mxu0 %v2317
      %2443 = vmatpush2.bf16.msra.mxu0 %v2316
      %2444 = vmatprep.subr.bf16.mxu0 %v2315
      %2445 = vmatpush2.bf16.msra.mxu0 %v2314
      %2446 = vmatprep.subr.bf16.mxu0 %v2313
      %2447 = vmatpush2.bf16.msra.mxu0 %v2312
      %2448 = vmatprep.subr.bf16.mxu0 %v2311
      %2449 = vmatpush2.bf16.msra.mxu0 %v2310
      %2450 = vmatprep.subr.bf16.mxu0 %v2309
      %2451 = vmatpush2.bf16.msra.mxu0 %v2308
      %2452 = vmatprep.mubr.bf16.mxu0 %v2021
      %2453 = vmatmul.mubr.bf16.gmra.mxu0 %v2020
      %v2454 = vpop.f32.mrf.mxu0
      %v2455 = vadd.f32 %v2093, %v2454
      %v2456 = vpop.f32.mrf.mxu0
      %v2457 = vadd.f32 %v2097, %v2456
      %v2458 = vpop.f32.mrf.mxu0
      %v2459 = vpop.f32.mrf.mxu0
      %2460 = vdwg.mxu0
      %2461 = vmatprep.subr.bf16.mxu0 %v2339
      %2462 = vmatpush1.bf16.msra.mxu0 %v2338
      %2463 = vmatprep.subr.bf16.mxu0 %v2337
      %2464 = vmatpush1.bf16.msra.mxu0 %v2336
      %2465 = vmatprep.subr.bf16.mxu0 %v2335
      %2466 = vmatpush1.bf16.msra.mxu0 %v2334
      %2467 = vmatprep.subr.bf16.mxu0 %v2333
      %2468 = vmatpush1.bf16.msra.mxu0 %v2332
      %2469 = vmatprep.subr.bf16.mxu0 %v2331
      %2470 = vmatpush1.bf16.msra.mxu0 %v2330
      %2471 = vmatprep.subr.bf16.mxu0 %v2329
      %2472 = vmatpush1.bf16.msra.mxu0 %v2328
      %2473 = vmatprep.subr.bf16.mxu0 %v2327
      %2474 = vmatpush1.bf16.msra.mxu0 %v2326
      %2475 = vmatprep.subr.bf16.mxu0 %v2325
      %2476 = vmatpush1.bf16.msra.mxu0 %v2324
      %2477 = vmatprep.subr.bf16.mxu0 %v2355
      %2478 = vmatpush2.bf16.msra.mxu0 %v2354
      %2479 = vmatprep.subr.bf16.mxu0 %v2353
      %2480 = vmatpush2.bf16.msra.mxu0 %v2352
      %2481 = vmatprep.subr.bf16.mxu0 %v2351
      %2482 = vmatpush2.bf16.msra.mxu0 %v2350
      %2483 = vmatprep.subr.bf16.mxu0 %v2349
      %2484 = vmatpush2.bf16.msra.mxu0 %v2348
      %2485 = vmatprep.subr.bf16.mxu0 %v2347
      %2486 = vmatpush2.bf16.msra.mxu0 %v2346
      %2487 = vmatprep.subr.bf16.mxu0 %v2345
      %2488 = vmatpush2.bf16.msra.mxu0 %v2344
      %2489 = vmatprep.subr.bf16.mxu0 %v2343
      %2490 = vmatpush2.bf16.msra.mxu0 %v2342
      %2491 = vmatprep.subr.bf16.mxu0 %v2341
      %2492 = vmatpush2.bf16.msra.mxu0 %v2340
      %2493 = vmatprep.mubr.bf16.mxu0 %v2023
      %2494 = vmatmul.mubr.bf16.gmra.mxu0 %v2022
      %v2495 = vpop.f32.mrf.mxu0
      %v2496 = vadd.f32 %v2455, %v2495
      %v2497 = vpop.f32.mrf.mxu0
      %v2498 = vadd.f32 %v2457, %v2497
      %v2499 = vpop.f32.mrf.mxu0
      %v2500 = vpop.f32.mrf.mxu0
      %2501 = vdwg.mxu0
      %vm2502 = vcmp.ge.f32.partialorder %v2496, 0.0
      %vm2503 = vcmp.ge.f32.partialorder %v2498, 0.0
      %v2504 = vmul.f32 %v2496, 0.2
      %v2505 = vmul.f32 %v2498, 0.2
      %v2506 = vsel %vm2502, %v2496, %v2504
      %v2507 = vsel %vm2503, %v2498, %v2505
      %v2508 = vpack.c.bf16 %v2506, %v2506
      %v2509 = vpack.c.bf16 %v2507, %v2507
      %v2510 = vld [vmem:[#allocation8] sm:$0xff]
      %v2511 = vld [vmem:[#allocation8 + $0x8] sm:$0xff]
      %v2512 = vld [vmem:[#allocation8 + $0x10] sm:$0xff]
      %v2513 = vld [vmem:[#allocation8 + $0x18] sm:$0xff]
      %v2514 = vld [vmem:[#allocation8 + $0x20] sm:$0xff]
      %v2515 = vld [vmem:[#allocation8 + $0x28] sm:$0xff]
      %v2516 = vld [vmem:[#allocation8 + $0x30] sm:$0xff]
      %v2517 = vld [vmem:[#allocation8 + $0x38] sm:$0xff]
      %v2518 = vld [vmem:[#allocation8 + $0x40] sm:$0xff]
      %v2519 = vld [vmem:[#allocation8 + $0x48] sm:$0xff]
      %v2520 = vld [vmem:[#allocation8 + $0x50] sm:$0xff]
      %v2521 = vld [vmem:[#allocation8 + $0x58] sm:$0xff]
      %v2522 = vld [vmem:[#allocation8 + $0x60] sm:$0xff]
      %v2523 = vld [vmem:[#allocation8 + $0x68] sm:$0xff]
      %v2524 = vld [vmem:[#allocation8 + $0x70] sm:$0xff]
      %v2525 = vld [vmem:[#allocation8 + $0x78] sm:$0xff]
      %v2526 = vld [vmem:[#allocation8 + $0x80] sm:$0xff]
      %v2527 = vld [vmem:[#allocation8 + $0x88] sm:$0xff]
      %v2528 = vld [vmem:[#allocation8 + $0x90] sm:$0xff]
      %v2529 = vld [vmem:[#allocation8 + $0x98] sm:$0xff]
      %v2530 = vld [vmem:[#allocation8 + $0xa0] sm:$0xff]
      %v2531 = vld [vmem:[#allocation8 + $0xa8] sm:$0xff]
      %v2532 = vld [vmem:[#allocation8 + $0xb0] sm:$0xff]
      %v2533 = vld [vmem:[#allocation8 + $0xb8] sm:$0xff]
      %v2534 = vld [vmem:[#allocation8 + $0xc0] sm:$0xff]
      %v2535 = vld [vmem:[#allocation8 + $0xc8] sm:$0xff]
      %v2536 = vld [vmem:[#allocation8 + $0xd0] sm:$0xff]
      %v2537 = vld [vmem:[#allocation8 + $0xd8] sm:$0xff]
      %v2538 = vld [vmem:[#allocation8 + $0xe0] sm:$0xff]
      %v2539 = vld [vmem:[#allocation8 + $0xe8] sm:$0xff]
      %v2540 = vld [vmem:[#allocation8 + $0xf0] sm:$0xff]
      %v2541 = vld [vmem:[#allocation8 + $0xf8] sm:$0xff]
      %v2542 = vld [vmem:[%s6] sm:$0x3]
      %v2544 = vlaneseq
      %v2545 = vshrl.u32 %v2544, 7
      %v2546 = vsub.s32 0, %v2545
      %v2547 = vrot.slane %v2542, %v2546
      %v2548 = vlaneseq
      %v2549 = vshrl.u32 %v2548, 7
      %v2550 = vsub.s32 1, %v2549
      %v2551 = vrot.slane %v2542, %v2550
      %v2586 = vunpack.c.l.b16 %v2510
      %v2587 = vunpack.c.h.b16 %v2510
      %v2588 = vunpack.c.l.b16 %v2511
      %v2589 = vunpack.c.h.b16 %v2511
      %v2590 = vunpack.c.l.b16 %v2512
      %v2591 = vunpack.c.h.b16 %v2512
      %v2592 = vunpack.c.l.b16 %v2513
      %v2593 = vunpack.c.h.b16 %v2513
      %v2594 = vunpack.c.l.b16 %v2514
      %v2595 = vunpack.c.h.b16 %v2514
      %v2596 = vunpack.c.l.b16 %v2515
      %v2597 = vunpack.c.h.b16 %v2515
      %v2598 = vunpack.c.l.b16 %v2516
      %v2599 = vunpack.c.h.b16 %v2516
      %v2600 = vunpack.c.l.b16 %v2517
      %v2601 = vunpack.c.h.b16 %v2517
      %v2602 = vunpack.c.l.b16 %v2518
      %v2603 = vunpack.c.h.b16 %v2518
      %v2604 = vunpack.c.l.b16 %v2519
      %v2605 = vunpack.c.h.b16 %v2519
      %v2606 = vunpack.c.l.b16 %v2520
      %v2607 = vunpack.c.h.b16 %v2520
      %v2608 = vunpack.c.l.b16 %v2521
      %v2609 = vunpack.c.h.b16 %v2521
      %v2610 = vunpack.c.l.b16 %v2522
      %v2611 = vunpack.c.h.b16 %v2522
      %v2612 = vunpack.c.l.b16 %v2523
      %v2613 = vunpack.c.h.b16 %v2523
      %v2614 = vunpack.c.l.b16 %v2524
      %v2615 = vunpack.c.h.b16 %v2524
      %v2616 = vunpack.c.l.b16 %v2525
      %v2617 = vunpack.c.h.b16 %v2525
      %v2618 = vunpack.c.l.b16 %v2526
      %v2619 = vunpack.c.h.b16 %v2526
      %v2620 = vunpack.c.l.b16 %v2527
      %v2621 = vunpack.c.h.b16 %v2527
      %v2622 = vunpack.c.l.b16 %v2528
      %v2623 = vunpack.c.h.b16 %v2528
      %v2624 = vunpack.c.l.b16 %v2529
      %v2625 = vunpack.c.h.b16 %v2529
      %v2626 = vunpack.c.l.b16 %v2530
      %v2627 = vunpack.c.h.b16 %v2530
      %v2628 = vunpack.c.l.b16 %v2531
      %v2629 = vunpack.c.h.b16 %v2531
      %v2630 = vunpack.c.l.b16 %v2532
      %v2631 = vunpack.c.h.b16 %v2532
      %v2632 = vunpack.c.l.b16 %v2533
      %v2633 = vunpack.c.h.b16 %v2533
      %v2634 = vunpack.c.l.b16 %v2534
      %v2635 = vunpack.c.h.b16 %v2534
      %v2636 = vunpack.c.l.b16 %v2535
      %v2637 = vunpack.c.h.b16 %v2535
      %v2638 = vunpack.c.l.b16 %v2536
      %v2639 = vunpack.c.h.b16 %v2536
      %v2640 = vunpack.c.l.b16 %v2537
      %v2641 = vunpack.c.h.b16 %v2537
      %v2642 = vunpack.c.l.b16 %v2538
      %v2643 = vunpack.c.h.b16 %v2538
      %v2644 = vunpack.c.l.b16 %v2539
      %v2645 = vunpack.c.h.b16 %v2539
      %v2646 = vunpack.c.l.b16 %v2540
      %v2647 = vunpack.c.h.b16 %v2540
      %v2648 = vunpack.c.l.b16 %v2541
      %v2649 = vunpack.c.h.b16 %v2541
      %v2650 = vpack.c.b16 %v2588, %v2586
      %v2651 = vpack.c.b16 %v2589, %v2587
      %v2652 = vpack.c.b16 %v2592, %v2590
      %v2653 = vpack.c.b16 %v2593, %v2591
      %v2654 = vpack.c.b16 %v2596, %v2594
      %v2655 = vpack.c.b16 %v2597, %v2595
      %v2656 = vpack.c.b16 %v2600, %v2598
      %v2657 = vpack.c.b16 %v2601, %v2599
      %v2658 = vpack.c.b16 %v2604, %v2602
      %v2659 = vpack.c.b16 %v2605, %v2603
      %v2660 = vpack.c.b16 %v2608, %v2606
      %v2661 = vpack.c.b16 %v2609, %v2607
      %v2662 = vpack.c.b16 %v2612, %v2610
      %v2663 = vpack.c.b16 %v2613, %v2611
      %v2664 = vpack.c.b16 %v2616, %v2614
      %v2665 = vpack.c.b16 %v2617, %v2615
      %v2666 = vpack.c.b16 %v2620, %v2618
      %v2667 = vpack.c.b16 %v2621, %v2619
      %v2668 = vpack.c.b16 %v2624, %v2622
      %v2669 = vpack.c.b16 %v2625, %v2623
      %v2670 = vpack.c.b16 %v2628, %v2626
      %v2671 = vpack.c.b16 %v2629, %v2627
      %v2672 = vpack.c.b16 %v2632, %v2630
      %v2673 = vpack.c.b16 %v2633, %v2631
      %v2674 = vpack.c.b16 %v2636, %v2634
      %v2675 = vpack.c.b16 %v2637, %v2635
      %v2676 = vpack.c.b16 %v2640, %v2638
      %v2677 = vpack.c.b16 %v2641, %v2639
      %v2678 = vpack.c.b16 %v2644, %v2642
      %v2679 = vpack.c.b16 %v2645, %v2643
      %v2680 = vpack.c.b16 %v2648, %v2646
      %v2681 = vpack.c.b16 %v2649, %v2647
      %2714 = vmatprep.subr.bf16.mxu0 %v2665
      %2715 = vmatpush1.bf16.msra.mxu0 %v2664
      %2716 = vmatprep.subr.bf16.mxu0 %v2663
      %2717 = vmatpush1.bf16.msra.mxu0 %v2662
      %2718 = vmatprep.subr.bf16.mxu0 %v2661
      %2719 = vmatpush1.bf16.msra.mxu0 %v2660
      %2720 = vmatprep.subr.bf16.mxu0 %v2659
      %2721 = vmatpush1.bf16.msra.mxu0 %v2658
      %2722 = vmatprep.subr.bf16.mxu0 %v2657
      %2723 = vmatpush1.bf16.msra.mxu0 %v2656
      %2724 = vmatprep.subr.bf16.mxu0 %v2655
      %2725 = vmatpush1.bf16.msra.mxu0 %v2654
      %2726 = vmatprep.subr.bf16.mxu0 %v2653
      %2727 = vmatpush1.bf16.msra.mxu0 %v2652
      %2728 = vmatprep.subr.bf16.mxu0 %v2651
      %2729 = vmatpush1.bf16.msra.mxu0 %v2650
      %2730 = vmatprep.subr.bf16.mxu0 %v2681
      %2731 = vmatpush2.bf16.msra.mxu0 %v2680
      %2732 = vmatprep.subr.bf16.mxu0 %v2679
      %2733 = vmatpush2.bf16.msra.mxu0 %v2678
      %2734 = vmatprep.subr.bf16.mxu0 %v2677
      %2735 = vmatpush2.bf16.msra.mxu0 %v2676
      %2736 = vmatprep.subr.bf16.mxu0 %v2675
      %2737 = vmatpush2.bf16.msra.mxu0 %v2674
      %2738 = vmatprep.subr.bf16.mxu0 %v2673
      %2739 = vmatpush2.bf16.msra.mxu0 %v2672
      %2740 = vmatprep.subr.bf16.mxu0 %v2671
      %2741 = vmatpush2.bf16.msra.mxu0 %v2670
      %2742 = vmatprep.subr.bf16.mxu0 %v2669
      %2743 = vmatpush2.bf16.msra.mxu0 %v2668
      %2744 = vmatprep.subr.bf16.mxu0 %v2667
      %2745 = vmatpush2.bf16.msra.mxu0 %v2666
      %2746 = vmatprep.mubr.bf16.mxu0 %v2509
      %2747 = vmatmul.mubr.bf16.gmra.mxu0 %v2508
      %v2748 = vpop.f32.mrf.mxu0
      %v2749 = vadd.f32 %v2547, %v2748
      %v2750 = vpop.f32.mrf.mxu0
      %v2751 = vadd.f32 %v2551, %v2750
      %v2752 = vpop.f32.mrf.mxu0
      %v2753 = vpop.f32.mrf.mxu0
      %2754 = vdwg.mxu0
      %vm2755 = vcmp.ge.f32.partialorder %v2749, 0.0
      %vm2756 = vcmp.ge.f32.partialorder %v2751, 0.0
      %v2757 = vmul.f32 %v2749, 0.2
      %v2758 = vmul.f32 %v2751, 0.2
      %v2759 = vsel %vm2755, %v2749, %v2757
      %v2760 = vsel %vm2756, %v2751, %v2758
      %v2761 = vld [vmem:[%s7] sm:$0x3]
      %v2763 = vlaneseq
      %v2764 = vshrl.u32 %v2763, 7
      %v2765 = vsub.s32 0, %v2764
      %v2766 = vrot.slane %v2761, %v2765
      %v2767 = vlaneseq
      %v2768 = vshrl.u32 %v2767, 7
      %v2769 = vsub.s32 1, %v2768
      %v2770 = vrot.slane %v2761, %v2769
      %v2773 = vmul.f32 %v2759, %v2766
      %v2774 = vmul.f32 %v2760, %v2770
      %v2775 = vadd.f32 %v2773, %v2774
      %2776 = vadd.xlane.f32.xlu0 %v2775
      %v2777 = vpop.xlane.xlu0 %2776
      %v2778 = vld [vmem:[#allocation3] sm:$0x1]
      %v2780 = vlaneseq
      %v2781 = vshrl.u32 %v2780, 7
      %v2782 = vsub.s32 0, %v2781
      %v2783 = vrot.slane %v2778, %v2782
      %v2785 = vadd.f32 %v2777, %v2783
      %vm2786 = vcmask 7168
      %2787 = vst.msk [vmem:[%s9] sm:$0xff] %vm2786, %v2785
    $region57: #{fc_discriminator_forward.1} parent=1 // pred_fallthru
      _
    // Predicated region
    $region58: #{fc_discriminator_forward.1} parent=1 // pred_check
      _
    $region59: #{fc_discriminator_forward.1} parent=1 // pred_check_branch
      %2789 = sbr.rel (0) target = $region61
    $region60: #{fc_discriminator_forward.1} parent=1 // pred_region
      _
    $region61: #{fc_discriminator_forward.1} parent=1 // pred_fallthru
      _
    // Predicated region
    $region62: #{fc_discriminator_forward.1} parent=1 // pred_check
      _
    $region63: #{fc_discriminator_forward.1} parent=1 // pred_check_branch
      %2791 = sbr.rel (0) target = $region65
    $region64: #{fc_discriminator_forward.1} parent=1 // pred_region
      _
    $region65: #{fc_discriminator_forward.1} parent=1 // pred_fallthru
      _
    %2792 = vsyncpa [#allocation5], 1
    %2793 = vsyncpa [#allocation7], 1

</llo_original>
